<compile_context>
chip_gen: v6e
topology: v6e:2x2x1
jax: 0.10.0
libtpu: 0.0.40
codegen_flags: <defaults>
</compile_context>

<pallas_src>
import numpy as np
import jax
import jax.numpy as jnp
from jax import lax
from jax.experimental import pallas as pl
from jax.experimental.pallas import tpu as pltpu

NEG_SLOPE = 0.01   # nn.LeakyReLU default
BN_EPS = 1e-5      # nn.BatchNorm1d default
DROPOUT_P = 0.2    # module default for nsamples > 1
NKMERS = 256
LANE = 128


def _rup(n, m):
    return ((n + m - 1) // m) * m


def _keep_threshold(p):
    # P(bits < thresh) = keep probability, with bits uniform in [0, 2^24).
    return int(round((1.0 - p) * float(1 << 24)))


def _vmem_limit_bytes(need_bytes):
    cap = 128 * 1024 * 1024
    try:
        if jax.devices()[0].platform == "tpu":
            cap = int(pltpu.get_tpu_info().vmem_capacity_bytes)
    except Exception:
        pass  # interpret mode / older runtimes: keep the conservative default
    return int(min(max(int(need_bytes), 32 * 1024 * 1024), int(0.85 * cap)))


# ----------------------------------- kernel -----------------------------------

def _make_kernel(B, H, Lp, NSp, dropout_p):
    keep_scale = 1.0 / (1.0 - dropout_p) if dropout_p > 0.0 else 1.0
    keep_thresh = _keep_threshold(dropout_p)

    def kernel(x_ref, ee0_ref, ee1_ref, ed0_ref, ed1_ref, eps_ref, bits_ref,
               w1_ref, b1_ref, w2a_ref, w2b_ref, b2_ref,
               g_ref, be_ref, wmulv_ref, bmulv_ref,
               wd1_ref, bd1_ref, wd2a_ref, wd2b_ref, bd2_ref,
               wout_ref, bout_ref,
               out_ref, mulv_ref):
        gamma = g_ref[...]
        beta = be_ref[...]

        def leaky(v):
            # max(v, 0.01*v) == LeakyReLU(0.01) and is one VPU op cheaper than where.
            return jnp.maximum(v, NEG_SLOPE * v)

        def drop(v, i):
            if dropout_p <= 0.0:
                return v
            # Integer threshold compare fused with the keep-scale multiply.
            return jnp.where(bits_ref[i] < keep_thresh, v * keep_scale, 0.0)

        def bnorm(v):
            # BatchNorm1d training mode: batch mean, biased variance (two-pass,
            # centered — same op count as E[x^2]-m^2 but no cancellation).
            mean = jnp.mean(v, axis=0, keepdims=True)
            c = v - mean
            var = jnp.mean(c * c, axis=0, keepdims=True)
            return c * (lax.rsqrt(var + BN_EPS) * gamma) + beta

        def softmax_rows(v):
            m = jnp.max(v, axis=1, keepdims=True)
            e = jnp.exp(v - m)
            inv = 1.0 / jnp.sum(e, axis=1, keepdims=True)
            return e * inv

        def rank2(c0, c1, w_ref):
            # (B,1) extras times the two extra weight rows — VPU rank-2 update.
            w = w_ref[...]
            return c0 * w[0:1, :] + c1 * w[1:2, :]

        def dot_bf16(a_f32, w_ref):
            return jnp.dot(a_f32.astype(jnp.bfloat16), w_ref[...],
                           preferred_element_type=jnp.float32)

        x = x_ref[...]            # (B, Dinp) bf16: [reads | kmers | logRc | loglen | 0]
        ee0 = ee0_ref[...]        # (B, 1) f32 log(Rc)
        ee1 = ee1_ref[...]        # (B, 1) f32 log(length)
        ed0 = ed0_ref[...]        # (B, 1) f32 log(Rc_xp)
        ed1 = ed1_ref[...]        # (B, 1) f32 log(length_xp)
        eps = eps_ref[...]        # (B, Lp) f32; lanes L, L+1 carry ed0, ed1

        # ---------------- encoder ----------------
        h = jnp.dot(x, w1_ref[...], preferred_element_type=jnp.float32) + b1_ref[...]
        h = bnorm(drop(leaky(h), 0))

        h = dot_bf16(h, w2a_ref) + rank2(ee0, ee1, w2b_ref) + b2_ref[...]
        h = bnorm(drop(leaky(h), 1))

        # ---------------- fused mu / logvar ----------------
        mulv = dot_bf16(h, wmulv_ref) + bmulv_ref[...]    # (B, 2*Lp) = [mu|0|lv|0]
        mulv_ref[...] = mulv
        mu_p = mulv[:, :Lp]
        lv_p = mulv[:, Lp:]

        # ---------------- reparameterize ----------------
        # Pad lanes of mu/lv are exactly 0 (zero weight columns, zero bias), so
        # exp(0)=1 and the decoder extras stashed in eps lanes L, L+1 pass through
        # unchanged into `latent` — they then ride the same 128-lane MXU pass.
        latent = mu_p + eps * jnp.exp(lv_p * 0.5)

        # ---------------- decoder (module reuses encodernorm gamma/beta) ----------------
        d = dot_bf16(latent, wd1_ref) + bd1_ref[...]      # extras folded into wd1
        d = bnorm(drop(leaky(d), 2))

        d = dot_bf16(d, wd2a_ref) + rank2(ed0, ed1, wd2b_ref) + bd2_ref[...]
        d = bnorm(drop(leaky(d), 3))

        # ---------------- fused, lane-dense output layer ----------------
        logits = dot_bf16(d, wout_ref) + bout_ref[...]    # (B, NSp + 256)
        out_ref[:, :NSp] = softmax_rows(logits[:, :NSp])  # reads (pad bias -1e30 -> 0)
        out_ref[:, NSp:] = softmax_rows(logits[:, NSp:])  # kmers

    return kernel


def vae_forward(kparams, inputs, nsamples, nlatent, *, dropout_p=DROPOUT_P):
    x, eps_p, bits = inputs["x"], inputs["eps"], inputs["bits"]
    B, Dinp = x.shape
    H = kparams["b1"].shape[1]
    Lp = eps_p.shape[1]
    NSp = kparams["wout"].shape[1] - NKMERS
    assert B % 8 == 0 and H % LANE == 0
    assert nsamples <= NSp and nlatent + 2 <= Lp
    assert kparams["wmulv"].shape[1] == 2 * Lp

    args = [x, inputs["ee0"], inputs["ee1"], inputs["ed0"], inputs["ed1"], eps_p, bits,
            kparams["w1"], kparams["b1"], kparams["w2a"], kparams["w2b"], kparams["b2"],
            kparams["gamma"], kparams["beta"], kparams["wmulv"], kparams["bmulv"],
            kparams["wd1"], kparams["bd1"],
            kparams["wd2a"], kparams["wd2b"], kparams["bd2"],
            kparams["wout"], kparams["bout"]]

    out_shapes = (jax.ShapeDtypeStruct((B, NSp + NKMERS), jnp.float32),
                  jax.ShapeDtypeStruct((B, 2 * Lp), jnp.float32))

    in_specs = [pl.BlockSpec(memory_space=pltpu.MemorySpace.VMEM)] * len(args)
    out_specs = tuple(pl.BlockSpec(memory_space=pltpu.MemorySpace.VMEM)
                      for _ in out_shapes)

    io_bytes = sum(int(np.prod(a.shape)) * jnp.dtype(a.dtype).itemsize for a in args)
    io_bytes += sum(int(np.prod(s.shape)) * jnp.dtype(s.dtype).itemsize
                    for s in out_shapes)
    wide = max(H, 2 * Lp, NSp + NKMERS)
    vmem_bytes = _vmem_limit_bytes(int(1.25 * io_bytes) + 10 * B * wide * 4 + (2 << 20))

    flops = 2 * B * (Dinp * H + 2 * H * H + H * 2 * Lp + Lp * H + H * (NSp + NKMERS))
    cost = pl.CostEstimate(flops=int(flops),
                           transcendentals=int(B * (Lp + NSp + NKMERS + 2)),
                           bytes_accessed=int(io_bytes))

    kernel = _make_kernel(B, H, Lp, NSp, dropout_p)
    fn = pl.pallas_call(
        kernel,
        out_shape=out_shapes,
        in_specs=in_specs,
        out_specs=out_specs,
        compiler_params=pltpu.CompilerParams(vmem_limit_bytes=vmem_bytes),
        cost_estimate=cost,
    )
    out_slab, mulv_slab = fn(*args)
    reads_out = out_slab[:, :nsamples]
    kmers_out = out_slab[:, NSp:]
    mu = mulv_slab[:, :nlatent]
    logvar = mulv_slab[:, Lp:Lp + nlatent]
    return reads_out, kmers_out, mu, logvar


# ----------------------------- parameter / input packing -----------------------------

def _linear(key, fan_in, fan_out):
    kw, kb = jax.random.split(key)
    bound = 1.0 / np.sqrt(fan_in)
    w = jax.random.uniform(kw, (fan_in, fan_out), jnp.float32, -bound, bound)
    b = jax.random.uniform(kb, (1, fan_out), jnp.float32, -bound, bound)
    return w, b


def init_params(key, nsamples, H, L):
    """Raw f32 params, pre-transposed to [in, out] (PyTorch-equivalent layout)."""
    ks = jax.random.split(key, 7)
    w1, b1 = _linear(ks[0], nsamples + NKMERS + 2, H)            # encoder_fc1
    w2, b2 = _linear(ks[1], H + 2, H)                            # encoder_fc2
    wmu, bmu = _linear(ks[2], H, L)                              # mu
    wlv, blv = _linear(ks[3], H, L)                              # logvar
    wd1, bd1 = _linear(ks[4], L + 2, H)                          # decoder_fc1
    wd2, bd2 = _linear(ks[5], H + 2, H)                          # decoder_fc2
    wo, bo = _linear(ks[6], H, nsamples + NKMERS)                # outputlayer
    return {"w1": w1, "b1": b1, "w2": w2, "b2": b2,
            "wmu": wmu, "bmu": bmu, "wlv": wlv, "blv": blv,
            "wd1": wd1, "bd1": bd1, "wd2": wd2, "bd2": bd2,
            "wo": wo, "bo": bo,
            "gamma": jnp.ones((1, H), jnp.float32),              # encodernorm default init
            "beta": jnp.zeros((1, H), jnp.float32)}


def pack_params(raw, nsamples, H, L):
    """Pad/fuse raw params into the lane-dense bf16 layout the kernel expects."""
    din = nsamples + NKMERS + 2
    dinp = _rup(din, LANE)
    lp = max(_rup(L + 2, LANE), LANE)
    nsp = _rup(nsamples, LANE)
    f32 = lambda a: np.asarray(a, np.float32)
    bf = lambda a: jnp.asarray(np.asarray(a, np.float32), dtype=jnp.bfloat16)
    jf = lambda a: jnp.asarray(np.asarray(a, np.float32))

    w1 = np.zeros((dinp, H), np.float32)
    w1[:din] = f32(raw["w1"])
    w2 = f32(raw["w2"])
    wmulv = np.zeros((H, 2 * lp), np.float32)
    wmulv[:, :L] = f32(raw["wmu"])
    wmulv[:, lp:lp + L] = f32(raw["wlv"])
    bmulv = np.zeros((1, 2 * lp), np.float32)
    bmulv[:, :L] = f32(raw["bmu"])
    bmulv[:, lp:lp + L] = f32(raw["blv"])
    wd1 = np.zeros((lp, H), np.float32)
    wd1[:L + 2] = f32(raw["wd1"])            # rows L, L+1 = decoder extras (the fold)
    wd2 = f32(raw["wd2"])
    wo, bo = f32(raw["wo"]), f32(raw["bo"])
    wout = np.zeros((H, nsp + NKMERS), np.float32)
    wout[:, :nsamples] = wo[:, :nsamples]
    wout[:, nsp:] = wo[:, nsamples:]
    bout = np.zeros((1, nsp + NKMERS), np.float32)
    bout[:, :nsamples] = bo[:, :nsamples]
    bout[:, nsamples:nsp] = -1e30            # pad lanes: exp() underflows to 0
    bout[:, nsp:] = bo[:, nsamples:]

    return {"w1": bf(w1), "b1": jf(raw["b1"]),
            "w2a": bf(w2[:H]), "w2b": jf(w2[H:]), "b2": jf(raw["b2"]),
            "gamma": jf(raw["gamma"]), "beta": jf(raw["beta"]),
            "wmulv": bf(wmulv), "bmulv": jf(bmulv),
            "wd1": bf(wd1), "bd1": jf(raw["bd1"]),
            "wd2a": bf(wd2[:H]), "wd2b": jf(wd2[H:]), "bd2": jf(raw["bd2"]),
            "wout": bf(wout), "bout": jf(bout)}


def pack_inputs(reads, kmers, Rc, Rc_xp, lengths, lengths_xp, eps, nlatent, nhidden,
                dropout_key):
    B, ns = reads.shape
    din = ns + NKMERS + 2
    dinp = _rup(din, LANE)
    lp = max(_rup(nlatent + 2, LANE), LANE)
    lRc = jnp.log(Rc)[:, None].astype(jnp.float32)
    lRcx = jnp.log(Rc_xp)[:, None].astype(jnp.float32)
    ll = jnp.log(lengths)[:, None].astype(jnp.float32)
    llx = jnp.log(lengths_xp)[:, None].astype(jnp.float32)
    x = jnp.concatenate(
        [reads.astype(jnp.float32), kmers.astype(jnp.float32), lRc, ll,
         jnp.zeros((B, dinp - din), jnp.float32)], axis=1).astype(jnp.bfloat16)
    # eps pad lanes nlatent, nlatent+1 carry the decoder extras (wd1 fold); rest zero.
    eps_p = jnp.concatenate(
        [eps.astype(jnp.float32), lRcx, llx,
         jnp.zeros((B, lp - nlatent - 2), jnp.float32)], axis=1)
    # Dropout random bits (24-bit, int32).  Callers must pass a fresh key per step.
    bits = jax.random.randint(dropout_key, (4, B, nhidden), 0, 1 << 24, dtype=jnp.int32)
    return {"x": x, "ee0": lRc, "ee1": ll, "ed0": lRcx, "ed1": llx,
            "eps": eps_p, "bits": bits}


# ----------------------------- float64 reference -----------------------------

def ref_forward_np(raw, inputs, nsamples, L, dropout_p):
    """f64 reference mirroring the PyTorch forward; matmul operands rounded to bf16
    (MXU input precision), accumulation/elementwise in f64; dropout masks derived
    from the same random bits the kernel consumes."""
    bf = lambda a: np.asarray(
        jnp.asarray(np.asarray(a, np.float32), jnp.bfloat16).astype(jnp.float32),
        np.float64)
    f64 = lambda a: np.asarray(a, np.float64)
    din = nsamples + NKMERS + 2

    x = f64(np.asarray(inputs["x"]).astype(np.float32))[:, :din]  # already bf16-quantized
    ee = np.concatenate([f64(inputs["ee0"]), f64(inputs["ee1"])], axis=1)
    ed = np.concatenate([f64(inputs["ed0"]), f64(inputs["ed1"])], axis=1)
    eps = f64(inputs["eps"])[:, :L]
    bits = np.asarray(inputs["bits"])
    if dropout_p > 0.0:
        masks = np.where(bits < _keep_threshold(dropout_p),
                         1.0 / (1.0 - dropout_p), 0.0).astype(np.float64)
    else:
        masks = np.ones(bits.shape, np.float64)
    gamma, beta = f64(raw["gamma"]), f64(raw["beta"])
    w2, wd2 = f64(raw["w2"]), f64(raw["wd2"])
    wo, bo = f64(raw["wo"]), f64(raw["bo"])
    H = w2.shape[1]

    leaky = lambda v: np.maximum(v, NEG_SLOPE * v)

    def bnorm(v):
        mean = v.mean(axis=0, keepdims=True)
        var = ((v - mean) ** 2).mean(axis=0, keepdims=True)
        return (v - mean) / np.sqrt(var + BN_EPS) * gamma + beta

    def softmax(v):
        e = np.exp(v - v.max(axis=1, keepdims=True))
        return e / e.sum(axis=1, keepdims=True)

    h = bnorm(leaky(x @ bf(raw["w1"]) + f64(raw["b1"])) * masks[0])
    h = bnorm(leaky(bf(h) @ bf(w2[:H]) + ee @ w2[H:] + f64(raw["b2"])) * masks[1])
    mu = bf(h) @ bf(raw["wmu"]) + f64(raw["bmu"])
    lv = bf(h) @ bf(raw["wlv"]) + f64(raw["blv"])
    latent = mu + eps * np.exp(lv / 2)
    lat_ext = np.concatenate([latent, ed], axis=1)        # extras folded like the kernel
    d = bnorm(leaky(bf(lat_ext) @ bf(raw["wd1"]) + f64(raw["bd1"])) * masks[2])
    d = bnorm(leaky(bf(d) @ bf(wd2[:H]) + ed @ wd2[H:] + f64(raw["bd2"])) * masks[3])
    reads = softmax(bf(d) @ bf(wo[:, :nsamples]) + bo[:, :nsamples])
    kmers = softmax(bf(d) @ bf(wo[:, nsamples:]) + bo[:, nsamples:])
    return reads, kmers, mu, lv


if __name__ == "__main__":
    B, NSAMPLES, H, L = 8, 4, 128, 32   # small shapes; nkmers fixed at 256 by the module

    key = jax.random.PRNGKey(0)
    kp, kr, kk, krcx, klen, klenx, keps, kdrop = jax.random.split(key, 8)

    raw = init_params(kp, NSAMPLES, H, L)
    kparams = pack_params(raw, NSAMPLES, H, L)

    # Synthetic "counts": raw positive counts, row-normalized as normalize_counts does.
    raw_reads = jax.random.uniform(kr, (B, NSAMPLES), jnp.float32, 1.0, 100.0)
    raw_kmers = jax.random.uniform(kk, (B, NKMERS), jnp.float32, 1.0, 10.0)
    reads = raw_reads / raw_reads.sum(axis=1, keepdims=True)
    kmers = raw_kmers / raw_kmers.sum(axis=1, keepdims=True)
    Rc = raw_reads.sum(axis=1)                                   # Rc_reads (unnormalized)
    Rc_xp = jax.random.uniform(krcx, (B,), jnp.float32, 50.0, 400.0)
    lengths = jax.random.uniform(klen, (B,), jnp.float32, 1000.0, 50000.0) - 3.0
    lengths_xp = jax.random.uniform(klenx, (B,), jnp.float32, 1000.0, 50000.0) - 3.0
    eps = jax.random.normal(keps, (B, L), jnp.float32)           # reparameterization noise

    inputs = pack_inputs(reads, kmers, Rc, Rc_xp, lengths, lengths_xp, eps, L, H, kdrop)

    reads_out, kmers_out, mu, logvar = jax.block_until_ready(
        vae_forward(kparams, inputs, NSAMPLES, L))

    # Dropout sanity: keep fraction of the shared bits should be ~0.8.
    keep_frac = float((np.asarray(inputs["bits"]) < _keep_threshold(DROPOUT_P)).mean())
    assert 0.6 < keep_frac < 0.95, f"suspicious dropout keep fraction {keep_frac}"

    r_ref, k_ref, mu_ref, lv_ref = ref_forward_np(raw, inputs, NSAMPLES, L, DROPOUT_P)
    np.testing.assert_allclose(np.asarray(reads_out), r_ref, rtol=3e-2, atol=5e-4)
    np.testing.assert_allclose(np.asarray(kmers_out), k_ref, rtol=3e-2, atol=5e-4)
    np.testing.assert_allclose(np.asarray(mu), mu_ref, rtol=2e-2, atol=3e-3)
    np.testing.assert_allclose(np.asarray(logvar), lv_ref, rtol=2e-2, atol=3e-3)

    for o in (reads_out, kmers_out, mu, logvar):
        assert np.all(np.isfinite(np.asarray(o)))
    np.testing.assert_allclose(np.asarray(reads_out).sum(axis=1), 1.0, rtol=5e-3)
    np.testing.assert_allclose(np.asarray(kmers_out).sum(axis=1), 1.0, rtol=5e-3)

    print("KERNEL_OK")
</pallas_src>

<mosaic_0001>
module attributes {stable_mosaic.version = 11 : i64} {
  func.func @kernel(%arg0: memref<8x384xbf16, #tpu.memory_space<vmem>>, %arg1: memref<8x1xf32, #tpu.memory_space<vmem>>, %arg2: memref<8x1xf32, #tpu.memory_space<vmem>>, %arg3: memref<8x1xf32, #tpu.memory_space<vmem>>, %arg4: memref<8x1xf32, #tpu.memory_space<vmem>>, %arg5: memref<8x128xf32, #tpu.memory_space<vmem>>, %arg6: memref<4x8x128xi32, #tpu.memory_space<vmem>>, %arg7: memref<384x128xbf16, #tpu.memory_space<vmem>>, %arg8: memref<1x128xf32, #tpu.memory_space<vmem>>, %arg9: memref<128x128xbf16, #tpu.memory_space<vmem>>, %arg10: memref<2x128xf32, #tpu.memory_space<vmem>>, %arg11: memref<1x128xf32, #tpu.memory_space<vmem>>, %arg12: memref<1x128xf32, #tpu.memory_space<vmem>>, %arg13: memref<1x128xf32, #tpu.memory_space<vmem>>, %arg14: memref<128x256xbf16, #tpu.memory_space<vmem>>, %arg15: memref<1x256xf32, #tpu.memory_space<vmem>>, %arg16: memref<128x128xbf16, #tpu.memory_space<vmem>>, %arg17: memref<1x128xf32, #tpu.memory_space<vmem>>, %arg18: memref<128x128xbf16, #tpu.memory_space<vmem>>, %arg19: memref<2x128xf32, #tpu.memory_space<vmem>>, %arg20: memref<1x128xf32, #tpu.memory_space<vmem>>, %arg21: memref<128x384xbf16, #tpu.memory_space<vmem>>, %arg22: memref<1x384xf32, #tpu.memory_space<vmem>>, %arg23: memref<8x384xf32, #tpu.memory_space<vmem>>, %arg24: memref<8x256xf32, #tpu.memory_space<vmem>>) attributes {dimension_semantics = [], scalar_prefetch = 0 : i64, scratch_operands = 0 : i64, tpu.core_type = #tpu.core_type<tc>} {
    %c0 = arith.constant 0 : index
    %c0_0 = arith.constant 0 : index
    %0 = vector.load %arg12[%c0, %c0_0] : memref<1x128xf32, #tpu.memory_space<vmem>>, vector<1x128xf32>
    %c0_1 = arith.constant 0 : index
    %c0_2 = arith.constant 0 : index
    %1 = vector.load %arg13[%c0_1, %c0_2] : memref<1x128xf32, #tpu.memory_space<vmem>>, vector<1x128xf32>
    %c0_3 = arith.constant 0 : index
    %c0_4 = arith.constant 0 : index
    %2 = vector.load %arg0[%c0_3, %c0_4] : memref<8x384xbf16, #tpu.memory_space<vmem>>, vector<8x384xbf16>
    %c0_5 = arith.constant 0 : index
    %c0_6 = arith.constant 0 : index
    %3 = vector.load %arg1[%c0_5, %c0_6] : memref<8x1xf32, #tpu.memory_space<vmem>>, vector<8x1xf32>
    %c0_7 = arith.constant 0 : index
    %c0_8 = arith.constant 0 : index
    %4 = vector.load %arg2[%c0_7, %c0_8] : memref<8x1xf32, #tpu.memory_space<vmem>>, vector<8x1xf32>
    %c0_9 = arith.constant 0 : index
    %c0_10 = arith.constant 0 : index
    %5 = vector.load %arg3[%c0_9, %c0_10] : memref<8x1xf32, #tpu.memory_space<vmem>>, vector<8x1xf32>
    %c0_11 = arith.constant 0 : index
    %c0_12 = arith.constant 0 : index
    %6 = vector.load %arg4[%c0_11, %c0_12] : memref<8x1xf32, #tpu.memory_space<vmem>>, vector<8x1xf32>
    %c0_13 = arith.constant 0 : index
    %c0_14 = arith.constant 0 : index
    %7 = vector.load %arg5[%c0_13, %c0_14] : memref<8x128xf32, #tpu.memory_space<vmem>>, vector<8x128xf32>
    %c0_15 = arith.constant 0 : index
    %c0_16 = arith.constant 0 : index
    %8 = vector.load %arg7[%c0_15, %c0_16] : memref<384x128xbf16, #tpu.memory_space<vmem>>, vector<384x128xbf16>
    %cst = arith.constant dense<0.000000e+00> : vector<8x128xf32>
    %9 = tpu.matmul %2, %8, %cst {dimension_numbers = #tpu.dot_dimension_numbers<[1], [0], [0], [1], [0, 0, 1, 1], [], []>} : vector<8x384xbf16>, vector<384x128xbf16>, vector<8x128xf32> -> vector<8x128xf32>
    %c0_17 = arith.constant 0 : index
    %c0_18 = arith.constant 0 : index
    %10 = vector.load %arg8[%c0_17, %c0_18] : memref<1x128xf32, #tpu.memory_space<vmem>>, vector<1x128xf32>
    %11 = vector.broadcast %10 : vector<1x128xf32> to vector<8x128xf32>
    %12 = arith.addf %9, %11 : vector<8x128xf32>
    %cst_19 = arith.constant 0.00999999977 : f32
    %13 = vector.broadcast %cst_19 : f32 to vector<8x128xf32>
    %14 = arith.mulf %13, %12 : vector<8x128xf32>
    %15 = arith.maximumf %12, %14 : vector<8x128xf32>
    %c0_20 = arith.constant 0 : index
    %c0_21 = arith.constant 0 : index
    %c0_22 = arith.constant 0 : index
    %16 = vector.load %arg6[%c0_20, %c0_21, %c0_22] : memref<4x8x128xi32, #tpu.memory_space<vmem>>, vector<1x8x128xi32>
    %17 = vector.shape_cast %16 : vector<1x8x128xi32> to vector<8x128xi32>
    %c13421773_i32 = arith.constant 13421773 : i32
    %18 = vector.broadcast %c13421773_i32 : i32 to vector<8x128xi32>
    %19 = arith.cmpi slt, %17, %18 : vector<8x128xi32>
    %cst_23 = arith.constant 1.250000e+00 : f32
    %20 = vector.broadcast %cst_23 : f32 to vector<8x128xf32>
    %21 = arith.mulf %15, %20 : vector<8x128xf32>
    %cst_24 = arith.constant 0.000000e+00 : f32
    %22 = vector.broadcast %cst_24 : f32 to vector<8x128xf32>
    %23 = arith.select %19, %21, %22 : vector<8x128xi1>, vector<8x128xf32>
    %cst_25 = arith.constant dense<0.000000e+00> : vector<128xf32>
    %24 = vector.multi_reduction <add>, %23, %cst_25 [0] : vector<8x128xf32> to vector<128xf32>
    %25 = vector.shape_cast %24 : vector<128xf32> to vector<1x128xf32>
    %cst_26 = arith.constant 8.000000e+00 : f32
    %26 = vector.broadcast %cst_26 : f32 to vector<1x128xf32>
    %27 = arith.divf %25, %26 : vector<1x128xf32>
    %28 = vector.broadcast %27 : vector<1x128xf32> to vector<8x128xf32>
    %29 = arith.subf %23, %28 : vector<8x128xf32>
    %30 = arith.mulf %29, %29 : vector<8x128xf32>
    %cst_27 = arith.constant dense<0.000000e+00> : vector<128xf32>
    %31 = vector.multi_reduction <add>, %30, %cst_27 [0] : vector<8x128xf32> to vector<128xf32>
    %32 = vector.shape_cast %31 : vector<128xf32> to vector<1x128xf32>
    %cst_28 = arith.constant 8.000000e+00 : f32
    %33 = vector.broadcast %cst_28 : f32 to vector<1x128xf32>
    %34 = arith.divf %32, %33 : vector<1x128xf32>
    %cst_29 = arith.constant 9.99999974E-6 : f32
    %35 = vector.broadcast %cst_29 : f32 to vector<1x128xf32>
    %36 = arith.addf %34, %35 : vector<1x128xf32>
    %37 = math.rsqrt %36 : vector<1x128xf32>
    %38 = arith.mulf %37, %0 : vector<1x128xf32>
    %39 = vector.broadcast %38 : vector<1x128xf32> to vector<8x128xf32>
    %40 = arith.mulf %29, %39 : vector<8x128xf32>
    %41 = vector.broadcast %1 : vector<1x128xf32> to vector<8x128xf32>
    %42 = arith.addf %40, %41 : vector<8x128xf32>
    %43 = arith.truncf %42 : vector<8x128xf32> to vector<8x128xbf16>
    %c0_30 = arith.constant 0 : index
    %c0_31 = arith.constant 0 : index
    %44 = vector.load %arg9[%c0_30, %c0_31] : memref<128x128xbf16, #tpu.memory_space<vmem>>, vector<128x128xbf16>
    %cst_32 = arith.constant dense<0.000000e+00> : vector<8x128xf32>
    %45 = tpu.matmul %43, %44, %cst_32 {dimension_numbers = #tpu.dot_dimension_numbers<[1], [0], [0], [1], [0, 0, 1, 1], [], []>} : vector<8x128xbf16>, vector<128x128xbf16>, vector<8x128xf32> -> vector<8x128xf32>
    %c0_33 = arith.constant 0 : index
    %c0_34 = arith.constant 0 : index
    %46 = vector.load %arg10[%c0_33, %c0_34] : memref<2x128xf32, #tpu.memory_space<vmem>>, vector<2x128xf32>
    %47 = vector.extract_strided_slice %46 {offsets = [0, 0], sizes = [1, 128], strides = [1, 1]} : vector<2x128xf32> to vector<1x128xf32>
    %48 = vector.broadcast %3 : vector<8x1xf32> to vector<8x128xf32>
    %49 = vector.broadcast %47 : vector<1x128xf32> to vector<8x128xf32>
    %50 = arith.mulf %48, %49 : vector<8x128xf32>
    %51 = vector.extract_strided_slice %46 {offsets = [1, 0], sizes = [1, 128], strides = [1, 1]} : vector<2x128xf32> to vector<1x128xf32>
    %52 = vector.broadcast %4 : vector<8x1xf32> to vector<8x128xf32>
    %53 = vector.broadcast %51 : vector<1x128xf32> to vector<8x128xf32>
    %54 = arith.mulf %52, %53 : vector<8x128xf32>
    %55 = arith.addf %50, %54 : vector<8x128xf32>
    %56 = arith.addf %45, %55 : vector<8x128xf32>
    %c0_35 = arith.constant 0 : index
    %c0_36 = arith.constant 0 : index
    %57 = vector.load %arg11[%c0_35, %c0_36] : memref<1x128xf32, #tpu.memory_space<vmem>>, vector<1x128xf32>
    %58 = vector.broadcast %57 : vector<1x128xf32> to vector<8x128xf32>
    %59 = arith.addf %56, %58 : vector<8x128xf32>
    %cst_37 = arith.constant 0.00999999977 : f32
    %60 = vector.broadcast %cst_37 : f32 to vector<8x128xf32>
    %61 = arith.mulf %60, %59 : vector<8x128xf32>
    %62 = arith.maximumf %59, %61 : vector<8x128xf32>
    %c1 = arith.constant 1 : index
    %c0_38 = arith.constant 0 : index
    %c0_39 = arith.constant 0 : index
    %63 = vector.load %arg6[%c1, %c0_38, %c0_39] : memref<4x8x128xi32, #tpu.memory_space<vmem>>, vector<1x8x128xi32>
    %64 = vector.shape_cast %63 : vector<1x8x128xi32> to vector<8x128xi32>
    %c13421773_i32_40 = arith.constant 13421773 : i32
    %65 = vector.broadcast %c13421773_i32_40 : i32 to vector<8x128xi32>
    %66 = arith.cmpi slt, %64, %65 : vector<8x128xi32>
    %cst_41 = arith.constant 1.250000e+00 : f32
    %67 = vector.broadcast %cst_41 : f32 to vector<8x128xf32>
    %68 = arith.mulf %62, %67 : vector<8x128xf32>
    %cst_42 = arith.constant 0.000000e+00 : f32
    %69 = vector.broadcast %cst_42 : f32 to vector<8x128xf32>
    %70 = arith.select %66, %68, %69 : vector<8x128xi1>, vector<8x128xf32>
    %cst_43 = arith.constant dense<0.000000e+00> : vector<128xf32>
    %71 = vector.multi_reduction <add>, %70, %cst_43 [0] : vector<8x128xf32> to vector<128xf32>
    %72 = vector.shape_cast %71 : vector<128xf32> to vector<1x128xf32>
    %cst_44 = arith.constant 8.000000e+00 : f32
    %73 = vector.broadcast %cst_44 : f32 to vector<1x128xf32>
    %74 = arith.divf %72, %73 : vector<1x128xf32>
    %75 = vector.broadcast %74 : vector<1x128xf32> to vector<8x128xf32>
    %76 = arith.subf %70, %75 : vector<8x128xf32>
    %77 = arith.mulf %76, %76 : vector<8x128xf32>
    %cst_45 = arith.constant dense<0.000000e+00> : vector<128xf32>
    %78 = vector.multi_reduction <add>, %77, %cst_45 [0] : vector<8x128xf32> to vector<128xf32>
    %79 = vector.shape_cast %78 : vector<128xf32> to vector<1x128xf32>
    %cst_46 = arith.constant 8.000000e+00 : f32
    %80 = vector.broadcast %cst_46 : f32 to vector<1x128xf32>
    %81 = arith.divf %79, %80 : vector<1x128xf32>
    %cst_47 = arith.constant 9.99999974E-6 : f32
    %82 = vector.broadcast %cst_47 : f32 to vector<1x128xf32>
    %83 = arith.addf %81, %82 : vector<1x128xf32>
    %84 = math.rsqrt %83 : vector<1x128xf32>
    %85 = arith.mulf %84, %0 : vector<1x128xf32>
    %86 = vector.broadcast %85 : vector<1x128xf32> to vector<8x128xf32>
    %87 = arith.mulf %76, %86 : vector<8x128xf32>
    %88 = vector.broadcast %1 : vector<1x128xf32> to vector<8x128xf32>
    %89 = arith.addf %87, %88 : vector<8x128xf32>
    %90 = arith.truncf %89 : vector<8x128xf32> to vector<8x128xbf16>
    %c0_48 = arith.constant 0 : index
    %c0_49 = arith.constant 0 : index
    %91 = vector.load %arg14[%c0_48, %c0_49] : memref<128x256xbf16, #tpu.memory_space<vmem>>, vector<128x256xbf16>
    %cst_50 = arith.constant dense<0.000000e+00> : vector<8x256xf32>
    %92 = tpu.matmul %90, %91, %cst_50 {dimension_numbers = #tpu.dot_dimension_numbers<[1], [0], [0], [1], [0, 0, 1, 1], [], []>} : vector<8x128xbf16>, vector<128x256xbf16>, vector<8x256xf32> -> vector<8x256xf32>
    %c0_51 = arith.constant 0 : index
    %c0_52 = arith.constant 0 : index
    %93 = vector.load %arg15[%c0_51, %c0_52] : memref<1x256xf32, #tpu.memory_space<vmem>>, vector<1x256xf32>
    %94 = vector.broadcast %93 : vector<1x256xf32> to vector<8x256xf32>
    %95 = arith.addf %92, %94 : vector<8x256xf32>
    %c0_53 = arith.constant 0 : index
    %c0_54 = arith.constant 0 : index
    %96 = vector.load %arg24[%c0_53, %c0_54] : memref<8x256xf32, #tpu.memory_space<vmem>>, vector<8x256xf32>
    tpu.vector_store %arg24[%c0_53, %c0_54], %95 {strides = array<i32>} : memref<8x256xf32, #tpu.memory_space<vmem>>, vector<8x256xf32>,
    %97 = vector.extract_strided_slice %95 {offsets = [0, 0], sizes = [8, 128], strides = [1, 1]} : vector<8x256xf32> to vector<8x128xf32>
    %98 = vector.extract_strided_slice %95 {offsets = [0, 128], sizes = [8, 128], strides = [1, 1]} : vector<8x256xf32> to vector<8x128xf32>
    %cst_55 = arith.constant 5.000000e-01 : f32
    %99 = vector.broadcast %cst_55 : f32 to vector<8x128xf32>
    %100 = arith.mulf %98, %99 : vector<8x128xf32>
    %101 = math.exp %100 : vector<8x128xf32>
    %102 = arith.mulf %7, %101 : vector<8x128xf32>
    %103 = arith.addf %97, %102 : vector<8x128xf32>
    %104 = arith.truncf %103 : vector<8x128xf32> to vector<8x128xbf16>
    %c0_56 = arith.constant 0 : index
    %c0_57 = arith.constant 0 : index
    %105 = vector.load %arg16[%c0_56, %c0_57] : memref<128x128xbf16, #tpu.memory_space<vmem>>, vector<128x128xbf16>
    %cst_58 = arith.constant dense<0.000000e+00> : vector<8x128xf32>
    %106 = tpu.matmul %104, %105, %cst_58 {dimension_numbers = #tpu.dot_dimension_numbers<[1], [0], [0], [1], [0, 0, 1, 1], [], []>} : vector<8x128xbf16>, vector<128x128xbf16>, vector<8x128xf32> -> vector<8x128xf32>
    %c0_59 = arith.constant 0 : index
    %c0_60 = arith.constant 0 : index
    %107 = vector.load %arg17[%c0_59, %c0_60] : memref<1x128xf32, #tpu.memory_space<vmem>>, vector<1x128xf32>
    %108 = vector.broadcast %107 : vector<1x128xf32> to vector<8x128xf32>
    %109 = arith.addf %106, %108 : vector<8x128xf32>
    %cst_61 = arith.constant 0.00999999977 : f32
    %110 = vector.broadcast %cst_61 : f32 to vector<8x128xf32>
    %111 = arith.mulf %110, %109 : vector<8x128xf32>
    %112 = arith.maximumf %109, %111 : vector<8x128xf32>
    %c2 = arith.constant 2 : index
    %c0_62 = arith.constant 0 : index
    %c0_63 = arith.constant 0 : index
    %113 = vector.load %arg6[%c2, %c0_62, %c0_63] : memref<4x8x128xi32, #tpu.memory_space<vmem>>, vector<1x8x128xi32>
    %114 = vector.shape_cast %113 : vector<1x8x128xi32> to vector<8x128xi32>
    %c13421773_i32_64 = arith.constant 13421773 : i32
    %115 = vector.broadcast %c13421773_i32_64 : i32 to vector<8x128xi32>
    %116 = arith.cmpi slt, %114, %115 : vector<8x128xi32>
    %cst_65 = arith.constant 1.250000e+00 : f32
    %117 = vector.broadcast %cst_65 : f32 to vector<8x128xf32>
    %118 = arith.mulf %112, %117 : vector<8x128xf32>
    %cst_66 = arith.constant 0.000000e+00 : f32
    %119 = vector.broadcast %cst_66 : f32 to vector<8x128xf32>
    %120 = arith.select %116, %118, %119 : vector<8x128xi1>, vector<8x128xf32>
    %cst_67 = arith.constant dense<0.000000e+00> : vector<128xf32>
    %121 = vector.multi_reduction <add>, %120, %cst_67 [0] : vector<8x128xf32> to vector<128xf32>
    %122 = vector.shape_cast %121 : vector<128xf32> to vector<1x128xf32>
    %cst_68 = arith.constant 8.000000e+00 : f32
    %123 = vector.broadcast %cst_68 : f32 to vector<1x128xf32>
    %124 = arith.divf %122, %123 : vector<1x128xf32>
    %125 = vector.broadcast %124 : vector<1x128xf32> to vector<8x128xf32>
    %126 = arith.subf %120, %125 : vector<8x128xf32>
    %127 = arith.mulf %126, %126 : vector<8x128xf32>
    %cst_69 = arith.constant dense<0.000000e+00> : vector<128xf32>
    %128 = vector.multi_reduction <add>, %127, %cst_69 [0] : vector<8x128xf32> to vector<128xf32>
    %129 = vector.shape_cast %128 : vector<128xf32> to vector<1x128xf32>
    %cst_70 = arith.constant 8.000000e+00 : f32
    %130 = vector.broadcast %cst_70 : f32 to vector<1x128xf32>
    %131 = arith.divf %129, %130 : vector<1x128xf32>
    %cst_71 = arith.constant 9.99999974E-6 : f32
    %132 = vector.broadcast %cst_71 : f32 to vector<1x128xf32>
    %133 = arith.addf %131, %132 : vector<1x128xf32>
    %134 = math.rsqrt %133 : vector<1x128xf32>
    %135 = arith.mulf %134, %0 : vector<1x128xf32>
    %136 = vector.broadcast %135 : vector<1x128xf32> to vector<8x128xf32>
    %137 = arith.mulf %126, %136 : vector<8x128xf32>
    %138 = vector.broadcast %1 : vector<1x128xf32> to vector<8x128xf32>
    %139 = arith.addf %137, %138 : vector<8x128xf32>
    %140 = arith.truncf %139 : vector<8x128xf32> to vector<8x128xbf16>
    %c0_72 = arith.constant 0 : index
    %c0_73 = arith.constant 0 : index
    %141 = vector.load %arg18[%c0_72, %c0_73] : memref<128x128xbf16, #tpu.memory_space<vmem>>, vector<128x128xbf16>
    %cst_74 = arith.constant dense<0.000000e+00> : vector<8x128xf32>
    %142 = tpu.matmul %140, %141, %cst_74 {dimension_numbers = #tpu.dot_dimension_numbers<[1], [0], [0], [1], [0, 0, 1, 1], [], []>} : vector<8x128xbf16>, vector<128x128xbf16>, vector<8x128xf32> -> vector<8x128xf32>
    %c0_75 = arith.constant 0 : index
    %c0_76 = arith.constant 0 : index
    %143 = vector.load %arg19[%c0_75, %c0_76] : memref<2x128xf32, #tpu.memory_space<vmem>>, vector<2x128xf32>
    %144 = vector.extract_strided_slice %143 {offsets = [0, 0], sizes = [1, 128], strides = [1, 1]} : vector<2x128xf32> to vector<1x128xf32>
    %145 = vector.broadcast %5 : vector<8x1xf32> to vector<8x128xf32>
    %146 = vector.broadcast %144 : vector<1x128xf32> to vector<8x128xf32>
    %147 = arith.mulf %145, %146 : vector<8x128xf32>
    %148 = vector.extract_strided_slice %143 {offsets = [1, 0], sizes = [1, 128], strides = [1, 1]} : vector<2x128xf32> to vector<1x128xf32>
    %149 = vector.broadcast %6 : vector<8x1xf32> to vector<8x128xf32>
    %150 = vector.broadcast %148 : vector<1x128xf32> to vector<8x128xf32>
    %151 = arith.mulf %149, %150 : vector<8x128xf32>
    %152 = arith.addf %147, %151 : vector<8x128xf32>
    %153 = arith.addf %142, %152 : vector<8x128xf32>
    %c0_77 = arith.constant 0 : index
    %c0_78 = arith.constant 0 : index
    %154 = vector.load %arg20[%c0_77, %c0_78] : memref<1x128xf32, #tpu.memory_space<vmem>>, vector<1x128xf32>
    %155 = vector.broadcast %154 : vector<1x128xf32> to vector<8x128xf32>
    %156 = arith.addf %153, %155 : vector<8x128xf32>
    %cst_79 = arith.constant 0.00999999977 : f32
    %157 = vector.broadcast %cst_79 : f32 to vector<8x128xf32>
    %158 = arith.mulf %157, %156 : vector<8x128xf32>
    %159 = arith.maximumf %156, %158 : vector<8x128xf32>
    %c3 = arith.constant 3 : index
    %c0_80 = arith.constant 0 : index
    %c0_81 = arith.constant 0 : index
    %160 = vector.load %arg6[%c3, %c0_80, %c0_81] : memref<4x8x128xi32, #tpu.memory_space<vmem>>, vector<1x8x128xi32>
    %161 = vector.shape_cast %160 : vector<1x8x128xi32> to vector<8x128xi32>
    %c13421773_i32_82 = arith.constant 13421773 : i32
    %162 = vector.broadcast %c13421773_i32_82 : i32 to vector<8x128xi32>
    %163 = arith.cmpi slt, %161, %162 : vector<8x128xi32>
    %cst_83 = arith.constant 1.250000e+00 : f32
    %164 = vector.broadcast %cst_83 : f32 to vector<8x128xf32>
    %165 = arith.mulf %159, %164 : vector<8x128xf32>
    %cst_84 = arith.constant 0.000000e+00 : f32
    %166 = vector.broadcast %cst_84 : f32 to vector<8x128xf32>
    %167 = arith.select %163, %165, %166 : vector<8x128xi1>, vector<8x128xf32>
    %cst_85 = arith.constant dense<0.000000e+00> : vector<128xf32>
    %168 = vector.multi_reduction <add>, %167, %cst_85 [0] : vector<8x128xf32> to vector<128xf32>
    %169 = vector.shape_cast %168 : vector<128xf32> to vector<1x128xf32>
    %cst_86 = arith.constant 8.000000e+00 : f32
    %170 = vector.broadcast %cst_86 : f32 to vector<1x128xf32>
    %171 = arith.divf %169, %170 : vector<1x128xf32>
    %172 = vector.broadcast %171 : vector<1x128xf32> to vector<8x128xf32>
    %173 = arith.subf %167, %172 : vector<8x128xf32>
    %174 = arith.mulf %173, %173 : vector<8x128xf32>
    %cst_87 = arith.constant dense<0.000000e+00> : vector<128xf32>
    %175 = vector.multi_reduction <add>, %174, %cst_87 [0] : vector<8x128xf32> to vector<128xf32>
    %176 = vector.shape_cast %175 : vector<128xf32> to vector<1x128xf32>
    %cst_88 = arith.constant 8.000000e+00 : f32
    %177 = vector.broadcast %cst_88 : f32 to vector<1x128xf32>
    %178 = arith.divf %176, %177 : vector<1x128xf32>
    %cst_89 = arith.constant 9.99999974E-6 : f32
    %179 = vector.broadcast %cst_89 : f32 to vector<1x128xf32>
    %180 = arith.addf %178, %179 : vector<1x128xf32>
    %181 = math.rsqrt %180 : vector<1x128xf32>
    %182 = arith.mulf %181, %0 : vector<1x128xf32>
    %183 = vector.broadcast %182 : vector<1x128xf32> to vector<8x128xf32>
    %184 = arith.mulf %173, %183 : vector<8x128xf32>
    %185 = vector.broadcast %1 : vector<1x128xf32> to vector<8x128xf32>
    %186 = arith.addf %184, %185 : vector<8x128xf32>
    %187 = arith.truncf %186 : vector<8x128xf32> to vector<8x128xbf16>
    %c0_90 = arith.constant 0 : index
    %c0_91 = arith.constant 0 : index
    %188 = vector.load %arg21[%c0_90, %c0_91] : memref<128x384xbf16, #tpu.memory_space<vmem>>, vector<128x384xbf16>
    %cst_92 = arith.constant dense<0.000000e+00> : vector<8x384xf32>
    %189 = tpu.matmul %187, %188, %cst_92 {dimension_numbers = #tpu.dot_dimension_numbers<[1], [0], [0], [1], [0, 0, 1, 1], [], []>} : vector<8x128xbf16>, vector<128x384xbf16>, vector<8x384xf32> -> vector<8x384xf32>
    %c0_93 = arith.constant 0 : index
    %c0_94 = arith.constant 0 : index
    %190 = vector.load %arg22[%c0_93, %c0_94] : memref<1x384xf32, #tpu.memory_space<vmem>>, vector<1x384xf32>
    %191 = vector.broadcast %190 : vector<1x384xf32> to vector<8x384xf32>
    %192 = arith.addf %189, %191 : vector<8x384xf32>
    %193 = vector.extract_strided_slice %192 {offsets = [0, 0], sizes = [8, 128], strides = [1, 1]} : vector<8x384xf32> to vector<8x128xf32>
    %cst_95 = arith.constant dense<0xFF800000> : vector<8xf32>
    %194 = vector.multi_reduction <maximumf>, %193, %cst_95 [1] : vector<8x128xf32> to vector<8xf32>
    %195 = vector.shape_cast %194 : vector<8xf32> to vector<8x1xf32>
    %196 = vector.broadcast %195 : vector<8x1xf32> to vector<8x128xf32>
    %197 = arith.subf %193, %196 : vector<8x128xf32>
    %198 = math.exp %197 : vector<8x128xf32>
    %cst_96 = arith.constant dense<0.000000e+00> : vector<8xf32>
    %199 = vector.multi_reduction <add>, %198, %cst_96 [1] : vector<8x128xf32> to vector<8xf32>
    %200 = vector.shape_cast %199 : vector<8xf32> to vector<8x1xf32>
    %cst_97 = arith.constant 1.000000e+00 : f32
    %201 = vector.broadcast %cst_97 : f32 to vector<8x1xf32>
    %202 = arith.divf %201, %200 : vector<8x1xf32>
    %203 = vector.broadcast %202 : vector<8x1xf32> to vector<8x128xf32>
    %204 = arith.mulf %198, %203 : vector<8x128xf32>
    %c0_98 = arith.constant 0 : index
    %c0_99 = arith.constant 0 : index
    %205 = vector.load %arg23[%c0_98, %c0_99] : memref<8x384xf32, #tpu.memory_space<vmem>>, vector<8x128xf32>
    tpu.vector_store %arg23[%c0_98, %c0_99], %204 {strides = array<i32>} : memref<8x384xf32, #tpu.memory_space<vmem>>, vector<8x128xf32>,
    %206 = vector.extract_strided_slice %192 {offsets = [0, 128], sizes = [8, 256], strides = [1, 1]} : vector<8x384xf32> to vector<8x256xf32>
    %cst_100 = arith.constant dense<0xFF800000> : vector<8xf32>
    %207 = vector.multi_reduction <maximumf>, %206, %cst_100 [1] : vector<8x256xf32> to vector<8xf32>
    %208 = vector.shape_cast %207 : vector<8xf32> to vector<8x1xf32>
    %209 = vector.broadcast %208 : vector<8x1xf32> to vector<8x256xf32>
    %210 = arith.subf %206, %209 : vector<8x256xf32>
    %211 = math.exp %210 : vector<8x256xf32>
    %cst_101 = arith.constant dense<0.000000e+00> : vector<8xf32>
    %212 = vector.multi_reduction <add>, %211, %cst_101 [1] : vector<8x256xf32> to vector<8xf32>
    %213 = vector.shape_cast %212 : vector<8xf32> to vector<8x1xf32>
    %cst_102 = arith.constant 1.000000e+00 : f32
    %214 = vector.broadcast %cst_102 : f32 to vector<8x1xf32>
    %215 = arith.divf %214, %213 : vector<8x1xf32>
    %216 = vector.broadcast %215 : vector<8x1xf32> to vector<8x256xf32>
    %217 = arith.mulf %211, %216 : vector<8x256xf32>
    %c0_103 = arith.constant 0 : index
    %c128 = arith.constant 128 : index
    %218 = vector.load %arg23[%c0_103, %c128] : memref<8x384xf32, #tpu.memory_space<vmem>>, vector<8x256xf32>
    tpu.vector_store %arg23[%c0_103, %c128], %217 {strides = array<i32>} : memref<8x384xf32, #tpu.memory_space<vmem>>, vector<8x256xf32>,
    return
  }
}

</mosaic_0001>

<llo_original>
// kernel: tpu_custom_call.1
$region0: #{tpu_custom_call.1}
  #allocation0 [shape = 'u32[]', space=smem, size = 0x4, offset = 0x4, fixed_abs, tag = 'smem constant byte address 0x4 - core index']
  #allocation1 [shape = 'u32[144,128]{1,0:T(1,128)}', space=vmem, size = 0x12000, scoped, tag = 'internal scratch']
  %s0 = inlined_call_operand.hbm [shape: bf16[8,384], index: 0, kind: input, shape index: {}]
  %s1 = inlined_call_operand.vmem [shape: f32[8,1], index: 1, kind: input, shape index: {}]
  %s2 = inlined_call_operand.vmem [shape: f32[8,1], index: 2, kind: input, shape index: {}]
  %s3 = inlined_call_operand.vmem [shape: f32[8,1], index: 3, kind: input, shape index: {}]
  %s4 = inlined_call_operand.vmem [shape: f32[8,1], index: 4, kind: input, shape index: {}]
  %s5 = inlined_call_operand.hbm [shape: f32[8,128], index: 5, kind: input, shape index: {}]
  %s6 = inlined_call_operand.hbm [shape: s32[4,8,128], index: 6, kind: input, shape index: {}]
  %s7 = inlined_call_operand.hbm [shape: bf16[384,128], index: 7, kind: input, shape index: {}]
  %s8 = inlined_call_operand.hbm [shape: f32[1,128], index: 8, kind: input, shape index: {}]
  %s9 = inlined_call_operand.hbm [shape: bf16[128,128], index: 9, kind: input, shape index: {}]
  %s10 = inlined_call_operand.hbm [shape: f32[2,128], index: 10, kind: input, shape index: {}]
  %s11 = inlined_call_operand.hbm [shape: f32[1,128], index: 11, kind: input, shape index: {}]
  %s12 = inlined_call_operand.hbm [shape: f32[1,128], index: 12, kind: input, shape index: {}]
  %s13 = inlined_call_operand.hbm [shape: f32[1,128], index: 13, kind: input, shape index: {}]
  %s14 = inlined_call_operand.hbm [shape: bf16[128,256], index: 14, kind: input, shape index: {}]
  %s15 = inlined_call_operand.hbm [shape: f32[1,256], index: 15, kind: input, shape index: {}]
  %s16 = inlined_call_operand.vmem [shape: bf16[128,128], index: 16, kind: input, shape index: {}]
  %s17 = inlined_call_operand.hbm [shape: f32[1,128], index: 17, kind: input, shape index: {}]
  %s18 = inlined_call_operand.hbm [shape: bf16[128,128], index: 18, kind: input, shape index: {}]
  %s19 = inlined_call_operand.vmem [shape: f32[2,128], index: 19, kind: input, shape index: {}]
  %s20 = inlined_call_operand.vmem [shape: f32[1,128], index: 20, kind: input, shape index: {}]
  %s21 = inlined_call_operand.hbm [shape: bf16[128,384], index: 21, kind: input, shape index: {}]
  %s22 = inlined_call_operand.vmem [shape: f32[1,384], index: 22, kind: input, shape index: {}]
  %s23 = inlined_call_operand.hbm [shape: f32[8,384], index: 23, kind: output, shape index: {0}]
  %s24 = inlined_call_operand.hbm [shape: f32[8,256], index: 24, kind: output, shape index: {1}]
  %25 = xla_tuple %s23, %s24
  %s26 = sld [smem:[#allocation0]]
  $region170: #{tpu_custom_call.1} parent=0
    _
  %s28 = ssub.s32 1, %s26
  %s29 = scalar_select 0, %s28, %s26
  $region1: #{tpu_custom_call.1} parent=0
    #allocation2 [shape = 'u8[6144]{0}', space=vmem, size = 0x1800, scoped, tag = 'input window, operand 0, single buffered']
    #allocation3 [shape = 's32[1]{0}', space=sflag, size = 0x4, scoped, tag = 'scoped memory for tpu_custom_call.1']
    #allocation4 [shape = 's32[1]{0}', space=sflag, size = 0x4, scoped, tag = 'scoped memory for tpu_custom_call.1']
    #allocation5 [shape = 'u8[4096]{0}', space=vmem, size = 0x1000, scoped, tag = 'input window, operand 5, single buffered']
    #allocation6 [shape = 's32[1]{0}', space=sflag, size = 0x4, scoped, tag = 'scoped memory for tpu_custom_call.1']
    #allocation7 [shape = 'u8[16384]{0}', space=vmem, size = 0x4000, scoped, tag = 'input window, operand 6, single buffered']
    #allocation8 [shape = 'u8[98304]{0}', space=vmem, size = 0x18000, scoped, tag = 'input window, operand 7, single buffered']
    #allocation9 [shape = 's32[1]{0}', space=sflag, size = 0x4, scoped, tag = 'scoped memory for tpu_custom_call.1']
    #allocation10 [shape = 'u8[512]{0}', space=vmem, size = 0x400, scoped, tag = 'input window, operand 8, single buffered']
    #allocation11 [shape = 'u8[32768]{0}', space=vmem, size = 0x8000, scoped, tag = 'input window, operand 9, single buffered']
    #allocation12 [shape = 's32[1]{0}', space=sflag, size = 0x4, scoped, tag = 'scoped memory for tpu_custom_call.1']
    #allocation13 [shape = 'u8[1024]{0}', space=vmem, size = 0x400, scoped, tag = 'input window, operand 10, single buffered']
    #allocation14 [shape = 'u8[512]{0}', space=vmem, size = 0x400, scoped, tag = 'input window, operand 11, single buffered']
    #allocation15 [shape = 's32[1]{0}', space=sflag, size = 0x4, scoped, tag = 'scoped memory for tpu_custom_call.1']
    #allocation16 [shape = 'u8[512]{0}', space=vmem, size = 0x400, scoped, tag = 'input window, operand 12, single buffered']
    #allocation17 [shape = 'u8[512]{0}', space=vmem, size = 0x400, scoped, tag = 'input window, operand 13, single buffered']
    #allocation18 [shape = 's32[1]{0}', space=sflag, size = 0x4, scoped, tag = 'scoped memory for tpu_custom_call.1']
    #allocation19 [shape = 'u8[65536]{0}', space=vmem, size = 0x10000, scoped, tag = 'input window, operand 14, single buffered']
    #allocation20 [shape = 'u8[1024]{0}', space=vmem, size = 0x400, scoped, tag = 'input window, operand 15, single buffered']
    #allocation21 [shape = 's32[1]{0}', space=sflag, size = 0x4, scoped, tag = 'scoped memory for tpu_custom_call.1']
    #allocation22 [shape = 'u8[512]{0}', space=vmem, size = 0x400, scoped, tag = 'input window, operand 17, single buffered']
    #allocation23 [shape = 'u8[32768]{0}', space=vmem, size = 0x8000, scoped, tag = 'input window, operand 18, single buffered']
    #allocation24 [shape = 's32[1]{0}', space=sflag, size = 0x4, scoped, tag = 'scoped memory for tpu_custom_call.1']
    #allocation25 [shape = 'u8[98304]{0}', space=vmem, size = 0x18000, scoped, tag = 'input window, operand 21, single buffered']
    #allocation26 [shape = 'u8[12288]{0}', space=vmem, size = 0x3000, scoped, tag = 'output window, operand 0, single buffered']
    #allocation27 [shape = 'u8[8192]{0}', space=vmem, size = 0x2000, scoped, tag = 'output window, operand 1, single buffered']
    #allocation28 [shape = 's32[1]{0}', space=sflag, size = 0x4, scoped, tag = 'scoped memory for tpu_custom_call.1']
    %30 = vsyncpa [#allocation3], 0
    %31 = vsyncpa [#allocation6], 0
    %32 = vsyncpa [#allocation9], 0
    %33 = vsyncpa [#allocation12], 0
    %34 = vsyncpa [#allocation15], 0
    %35 = vsyncpa [#allocation18], 0
    %36 = vsyncpa [#allocation21], 0
    %37 = vsyncpa [#allocation24], 0
    %38 = vsyncpa [#allocation4], 0
    %39 = vsyncpa [#allocation28], 0
    // Predicated region
    $region2: #{tpu_custom_call.1} parent=1 // pred_check
      _
    $region3: #{tpu_custom_call.1} parent=1 // pred_check_branch
      %41 = sbr.rel (0) target = $region5
    $region4: #{tpu_custom_call.1} parent=1 // pred_region
      %s43 = ssub.s32 192, 192
      %44 = vsyncadd [#allocation3], %s43
      %s46 = sshll.u32 [#allocation2], 4
      %s47 = int_to_ptr.vmem [resolvable:$true] %s46
      %49 = dma.hbm_to_vmem [thread:$0]  %s0, 192, %s47, [#allocation3]
    $region5: #{tpu_custom_call.1} parent=1 // pred_fallthru
      _
    // Predicated region
    $region6: #{tpu_custom_call.1} parent=1 // pred_check
      _
    $region7: #{tpu_custom_call.1} parent=1 // pred_check_branch
      %51 = sbr.rel (0) target = $region9
    $region8: #{tpu_custom_call.1} parent=1 // pred_region
      _
    $region9: #{tpu_custom_call.1} parent=1 // pred_fallthru
      _
    // Predicated region
    $region10: #{tpu_custom_call.1} parent=1 // pred_check
      _
    $region11: #{tpu_custom_call.1} parent=1 // pred_check_branch
      %53 = sbr.rel (0) target = $region13
    $region12: #{tpu_custom_call.1} parent=1 // pred_region
      _
    $region13: #{tpu_custom_call.1} parent=1 // pred_fallthru
      _
    // Predicated region
    $region14: #{tpu_custom_call.1} parent=1 // pred_check
      _
    $region15: #{tpu_custom_call.1} parent=1 // pred_check_branch
      %55 = sbr.rel (0) target = $region17
    $region16: #{tpu_custom_call.1} parent=1 // pred_region
      _
    $region17: #{tpu_custom_call.1} parent=1 // pred_fallthru
      _
    // Predicated region
    $region18: #{tpu_custom_call.1} parent=1 // pred_check
      _
    $region19: #{tpu_custom_call.1} parent=1 // pred_check_branch
      %57 = sbr.rel (0) target = $region21
    $region20: #{tpu_custom_call.1} parent=1 // pred_region
      _
    $region21: #{tpu_custom_call.1} parent=1 // pred_fallthru
      _
    // Predicated region
    $region22: #{tpu_custom_call.1} parent=1 // pred_check
      _
    $region23: #{tpu_custom_call.1} parent=1 // pred_check_branch
      %59 = sbr.rel (0) target = $region25
    $region24: #{tpu_custom_call.1} parent=1 // pred_region
      %s61 = ssub.s32 128, 128
      %62 = vsyncadd [#allocation6], %s61
      %s64 = sshll.u32 [#allocation5], 4
      %s65 = int_to_ptr.vmem [resolvable:$true] %s64
      %67 = dma.hbm_to_vmem [thread:$0]  %s5, 128, %s65, [#allocation6]
    $region25: #{tpu_custom_call.1} parent=1 // pred_fallthru
      _
    // Predicated region
    $region26: #{tpu_custom_call.1} parent=1 // pred_check
      _
    $region27: #{tpu_custom_call.1} parent=1 // pred_check_branch
      %69 = sbr.rel (0) target = $region29
    $region28: #{tpu_custom_call.1} parent=1 // pred_region
      %s71 = ssub.s32 512, 512
      %72 = vsyncadd [#allocation6], %s71
      %s73 = sshll.u32 [#allocation7], 4
      %s74 = int_to_ptr.vmem [resolvable:$true] %s73
      %79 = dma.hbm_to_vmem [thread:$0]  %s6, 512, %s74, [#allocation6], 128, 128, 8
    $region29: #{tpu_custom_call.1} parent=1 // pred_fallthru
      _
    // Predicated region
    $region30: #{tpu_custom_call.1} parent=1 // pred_check
      _
    $region31: #{tpu_custom_call.1} parent=1 // pred_check_branch
      %81 = sbr.rel (0) target = $region33
    $region32: #{tpu_custom_call.1} parent=1 // pred_region
      %s83 = ssub.s32 3072, 3072
      %84 = vsyncadd [#allocation9], %s83
      %s85 = sshll.u32 [#allocation8], 4
      %s86 = int_to_ptr.vmem [resolvable:$true] %s85
      %91 = dma.hbm_to_vmem [thread:$0]  %s7, 3072, %s86, [#allocation9], 64, 64, 4
    $region33: #{tpu_custom_call.1} parent=1 // pred_fallthru
      _
    // Predicated region
    $region34: #{tpu_custom_call.1} parent=1 // pred_check
      _
    $region35: #{tpu_custom_call.1} parent=1 // pred_check_branch
      %93 = sbr.rel (0) target = $region37
    $region36: #{tpu_custom_call.1} parent=1 // pred_region
      %s95 = ssub.s32 16, 16
      %96 = vsyncadd [#allocation9], %s95
      %s98 = sshll.u32 [#allocation10], 4
      %s99 = int_to_ptr.vmem [resolvable:$true] %s98
      %101 = dma.hbm_to_vmem [thread:$0]  %s8, 16, %s99, [#allocation9]
    $region37: #{tpu_custom_call.1} parent=1 // pred_fallthru
      _
    // Predicated region
    $region38: #{tpu_custom_call.1} parent=1 // pred_check
      _
    $region39: #{tpu_custom_call.1} parent=1 // pred_check_branch
      %103 = sbr.rel (0) target = $region41
    $region40: #{tpu_custom_call.1} parent=1 // pred_region
      %s105 = ssub.s32 1024, 1024
      %106 = vsyncadd [#allocation12], %s105
      %s107 = sshll.u32 [#allocation11], 4
      %s108 = int_to_ptr.vmem [resolvable:$true] %s107
      %113 = dma.hbm_to_vmem [thread:$0]  %s9, 1024, %s108, [#allocation12], 64, 64, 4
    $region41: #{tpu_custom_call.1} parent=1 // pred_fallthru
      _
    // Predicated region
    $region42: #{tpu_custom_call.1} parent=1 // pred_check
      _
    $region43: #{tpu_custom_call.1} parent=1 // pred_check_branch
      %115 = sbr.rel (0) target = $region45
    $region44: #{tpu_custom_call.1} parent=1 // pred_region
      %s117 = ssub.s32 32, 32
      %118 = vsyncadd [#allocation12], %s117
      %s120 = sshll.u32 [#allocation13], 4
      %s121 = int_to_ptr.vmem [resolvable:$true] %s120
      %123 = dma.hbm_to_vmem [thread:$0]  %s10, 32, %s121, [#allocation12]
    $region45: #{tpu_custom_call.1} parent=1 // pred_fallthru
      _
    // Predicated region
    $region46: #{tpu_custom_call.1} parent=1 // pred_check
      _
    $region47: #{tpu_custom_call.1} parent=1 // pred_check_branch
      %125 = sbr.rel (0) target = $region49
    $region48: #{tpu_custom_call.1} parent=1 // pred_region
      %s127 = ssub.s32 16, 16
      %128 = vsyncadd [#allocation15], %s127
      %s130 = sshll.u32 [#allocation14], 4
      %s131 = int_to_ptr.vmem [resolvable:$true] %s130
      %133 = dma.hbm_to_vmem [thread:$0]  %s11, 16, %s131, [#allocation15]
    $region49: #{tpu_custom_call.1} parent=1 // pred_fallthru
      _
    // Predicated region
    $region50: #{tpu_custom_call.1} parent=1 // pred_check
      _
    $region51: #{tpu_custom_call.1} parent=1 // pred_check_branch
      %135 = sbr.rel (0) target = $region53
    $region52: #{tpu_custom_call.1} parent=1 // pred_region
      %s137 = ssub.s32 16, 16
      %138 = vsyncadd [#allocation15], %s137
      %s140 = sshll.u32 [#allocation16], 4
      %s141 = int_to_ptr.vmem [resolvable:$true] %s140
      %143 = dma.hbm_to_vmem [thread:$0]  %s12, 16, %s141, [#allocation15]
    $region53: #{tpu_custom_call.1} parent=1 // pred_fallthru
      _
    // Predicated region
    $region54: #{tpu_custom_call.1} parent=1 // pred_check
      _
    $region55: #{tpu_custom_call.1} parent=1 // pred_check_branch
      %145 = sbr.rel (0) target = $region57
    $region56: #{tpu_custom_call.1} parent=1 // pred_region
      %s147 = ssub.s32 16, 16
      %148 = vsyncadd [#allocation18], %s147
      %s150 = sshll.u32 [#allocation17], 4
      %s151 = int_to_ptr.vmem [resolvable:$true] %s150
      %153 = dma.hbm_to_vmem [thread:$0]  %s13, 16, %s151, [#allocation18]
    $region57: #{tpu_custom_call.1} parent=1 // pred_fallthru
      _
    // Predicated region
    $region58: #{tpu_custom_call.1} parent=1 // pred_check
      _
    $region59: #{tpu_custom_call.1} parent=1 // pred_check_branch
      %155 = sbr.rel (0) target = $region61
    $region60: #{tpu_custom_call.1} parent=1 // pred_region
      %s157 = ssub.s32 2048, 2048
      %158 = vsyncadd [#allocation18], %s157
      %s159 = sshll.u32 [#allocation19], 4
      %s160 = int_to_ptr.vmem [resolvable:$true] %s159
      %165 = dma.hbm_to_vmem [thread:$0]  %s14, 2048, %s160, [#allocation18], 128, 128, 8
    $region61: #{tpu_custom_call.1} parent=1 // pred_fallthru
      _
    // Predicated region
    $region62: #{tpu_custom_call.1} parent=1 // pred_check
      _
    $region63: #{tpu_custom_call.1} parent=1 // pred_check_branch
      %167 = sbr.rel (0) target = $region65
    $region64: #{tpu_custom_call.1} parent=1 // pred_region
      %s169 = ssub.s32 32, 32
      %170 = vsyncadd [#allocation21], %s169
      %s172 = sshll.u32 [#allocation20], 4
      %s173 = int_to_ptr.vmem [resolvable:$true] %s172
      %175 = dma.hbm_to_vmem [thread:$0]  %s15, 32, %s173, [#allocation21]
    $region65: #{tpu_custom_call.1} parent=1 // pred_fallthru
      _
    // Predicated region
    $region66: #{tpu_custom_call.1} parent=1 // pred_check
      _
    $region67: #{tpu_custom_call.1} parent=1 // pred_check_branch
      %177 = sbr.rel (0) target = $region69
    $region68: #{tpu_custom_call.1} parent=1 // pred_region
      _
    $region69: #{tpu_custom_call.1} parent=1 // pred_fallthru
      _
    // Predicated region
    $region70: #{tpu_custom_call.1} parent=1 // pred_check
      _
    $region71: #{tpu_custom_call.1} parent=1 // pred_check_branch
      %179 = sbr.rel (0) target = $region73
    $region72: #{tpu_custom_call.1} parent=1 // pred_region
      %s181 = ssub.s32 16, 16
      %182 = vsyncadd [#allocation21], %s181
      %s184 = sshll.u32 [#allocation22], 4
      %s185 = int_to_ptr.vmem [resolvable:$true] %s184
      %187 = dma.hbm_to_vmem [thread:$0]  %s17, 16, %s185, [#allocation21]
    $region73: #{tpu_custom_call.1} parent=1 // pred_fallthru
      _
    // Predicated region
    $region74: #{tpu_custom_call.1} parent=1 // pred_check
      _
    $region75: #{tpu_custom_call.1} parent=1 // pred_check_branch
      %189 = sbr.rel (0) target = $region77
    $region76: #{tpu_custom_call.1} parent=1 // pred_region
      %s191 = ssub.s32 1024, 1024
      %192 = vsyncadd [#allocation24], %s191
      %s193 = sshll.u32 [#allocation23], 4
      %s194 = int_to_ptr.vmem [resolvable:$true] %s193
      %199 = dma.hbm_to_vmem [thread:$0]  %s18, 1024, %s194, [#allocation24], 64, 64, 4
    $region77: #{tpu_custom_call.1} parent=1 // pred_fallthru
      _
    // Predicated region
    $region78: #{tpu_custom_call.1} parent=1 // pred_check
      _
    $region79: #{tpu_custom_call.1} parent=1 // pred_check_branch
      %201 = sbr.rel (0) target = $region81
    $region80: #{tpu_custom_call.1} parent=1 // pred_region
      _
    $region81: #{tpu_custom_call.1} parent=1 // pred_fallthru
      _
    // Predicated region
    $region82: #{tpu_custom_call.1} parent=1 // pred_check
      _
    $region83: #{tpu_custom_call.1} parent=1 // pred_check_branch
      %203 = sbr.rel (0) target = $region85
    $region84: #{tpu_custom_call.1} parent=1 // pred_region
      _
    $region85: #{tpu_custom_call.1} parent=1 // pred_fallthru
      _
    // Predicated region
    $region86: #{tpu_custom_call.1} parent=1 // pred_check
      _
    $region87: #{tpu_custom_call.1} parent=1 // pred_check_branch
      %205 = sbr.rel (0) target = $region89
    $region88: #{tpu_custom_call.1} parent=1 // pred_region
      %s207 = ssub.s32 3072, 3072
      %208 = vsyncadd [#allocation24], %s207
      %s209 = sshll.u32 [#allocation25], 4
      %s210 = int_to_ptr.vmem [resolvable:$true] %s209
      %215 = dma.hbm_to_vmem [thread:$0]  %s21, 3072, %s210, [#allocation24], 192, 192, 12
    $region89: #{tpu_custom_call.1} parent=1 // pred_fallthru
      _
    // Predicated region
    $region90: #{tpu_custom_call.1} parent=1 // pred_check
      _
    $region91: #{tpu_custom_call.1} parent=1 // pred_check_branch
      %217 = sbr.rel (0) target = $region93
    $region92: #{tpu_custom_call.1} parent=1 // pred_region
      _
    $region93: #{tpu_custom_call.1} parent=1 // pred_fallthru
      _
    // Predicated region
    $region94: #{tpu_custom_call.1} parent=1 // pred_check
      _
    $region95: #{tpu_custom_call.1} parent=1 // pred_check_branch
      %219 = sbr.rel (0) target = $region97
    $region96: #{tpu_custom_call.1} parent=1 // pred_region
      %220 = dma.done [#allocation3], 192
    $region97: #{tpu_custom_call.1} parent=1 // pred_fallthru
      _
    // Predicated region
    $region98: #{tpu_custom_call.1} parent=1 // pred_check
      _
    $region99: #{tpu_custom_call.1} parent=1 // pred_check_branch
      %222 = sbr.rel (0) target = $region101
    $region100: #{tpu_custom_call.1} parent=1 // pred_region
      %223 = dma.done [#allocation6], 128
    $region101: #{tpu_custom_call.1} parent=1 // pred_fallthru
      _
    // Predicated region
    $region102: #{tpu_custom_call.1} parent=1 // pred_check
      _
    $region103: #{tpu_custom_call.1} parent=1 // pred_check_branch
      %225 = sbr.rel (0) target = $region105
    $region104: #{tpu_custom_call.1} parent=1 // pred_region
      %226 = dma.done [#allocation6], 512
    $region105: #{tpu_custom_call.1} parent=1 // pred_fallthru
      _
    // Predicated region
    $region106: #{tpu_custom_call.1} parent=1 // pred_check
      _
    $region107: #{tpu_custom_call.1} parent=1 // pred_check_branch
      %228 = sbr.rel (0) target = $region109
    $region108: #{tpu_custom_call.1} parent=1 // pred_region
      %229 = dma.done [#allocation9], 3072
    $region109: #{tpu_custom_call.1} parent=1 // pred_fallthru
      _
    // Predicated region
    $region110: #{tpu_custom_call.1} parent=1 // pred_check
      _
    $region111: #{tpu_custom_call.1} parent=1 // pred_check_branch
      %231 = sbr.rel (0) target = $region113
    $region112: #{tpu_custom_call.1} parent=1 // pred_region
      %232 = dma.done [#allocation9], 16
    $region113: #{tpu_custom_call.1} parent=1 // pred_fallthru
      _
    // Predicated region
    $region114: #{tpu_custom_call.1} parent=1 // pred_check
      _
    $region115: #{tpu_custom_call.1} parent=1 // pred_check_branch
      %234 = sbr.rel (0) target = $region117
    $region116: #{tpu_custom_call.1} parent=1 // pred_region
      %235 = dma.done [#allocation12], 1024
    $region117: #{tpu_custom_call.1} parent=1 // pred_fallthru
      _
    // Predicated region
    $region118: #{tpu_custom_call.1} parent=1 // pred_check
      _
    $region119: #{tpu_custom_call.1} parent=1 // pred_check_branch
      %237 = sbr.rel (0) target = $region121
    $region120: #{tpu_custom_call.1} parent=1 // pred_region
      %238 = dma.done [#allocation12], 32
    $region121: #{tpu_custom_call.1} parent=1 // pred_fallthru
      _
    // Predicated region
    $region122: #{tpu_custom_call.1} parent=1 // pred_check
      _
    $region123: #{tpu_custom_call.1} parent=1 // pred_check_branch
      %240 = sbr.rel (0) target = $region125
    $region124: #{tpu_custom_call.1} parent=1 // pred_region
      %241 = dma.done [#allocation15], 16
    $region125: #{tpu_custom_call.1} parent=1 // pred_fallthru
      _
    // Predicated region
    $region126: #{tpu_custom_call.1} parent=1 // pred_check
      _
    $region127: #{tpu_custom_call.1} parent=1 // pred_check_branch
      %243 = sbr.rel (0) target = $region129
    $region128: #{tpu_custom_call.1} parent=1 // pred_region
      %244 = dma.done [#allocation15], 16
    $region129: #{tpu_custom_call.1} parent=1 // pred_fallthru
      _
    // Predicated region
    $region130: #{tpu_custom_call.1} parent=1 // pred_check
      _
    $region131: #{tpu_custom_call.1} parent=1 // pred_check_branch
      %246 = sbr.rel (0) target = $region133
    $region132: #{tpu_custom_call.1} parent=1 // pred_region
      %247 = dma.done [#allocation18], 16
    $region133: #{tpu_custom_call.1} parent=1 // pred_fallthru
      _
    // Predicated region
    $region134: #{tpu_custom_call.1} parent=1 // pred_check
      _
    $region135: #{tpu_custom_call.1} parent=1 // pred_check_branch
      %249 = sbr.rel (0) target = $region137
    $region136: #{tpu_custom_call.1} parent=1 // pred_region
      %250 = dma.done [#allocation18], 2048
    $region137: #{tpu_custom_call.1} parent=1 // pred_fallthru
      _
    // Predicated region
    $region138: #{tpu_custom_call.1} parent=1 // pred_check
      _
    $region139: #{tpu_custom_call.1} parent=1 // pred_check_branch
      %252 = sbr.rel (0) target = $region141
    $region140: #{tpu_custom_call.1} parent=1 // pred_region
      %253 = dma.done [#allocation21], 32
    $region141: #{tpu_custom_call.1} parent=1 // pred_fallthru
      _
    // Predicated region
    $region142: #{tpu_custom_call.1} parent=1 // pred_check
      _
    $region143: #{tpu_custom_call.1} parent=1 // pred_check_branch
      %255 = sbr.rel (0) target = $region145
    $region144: #{tpu_custom_call.1} parent=1 // pred_region
      %256 = dma.done [#allocation21], 16
    $region145: #{tpu_custom_call.1} parent=1 // pred_fallthru
      _
    // Predicated region
    $region146: #{tpu_custom_call.1} parent=1 // pred_check
      _
    $region147: #{tpu_custom_call.1} parent=1 // pred_check_branch
      %258 = sbr.rel (0) target = $region149
    $region148: #{tpu_custom_call.1} parent=1 // pred_region
      %259 = dma.done [#allocation24], 1024
    $region149: #{tpu_custom_call.1} parent=1 // pred_fallthru
      _
    // Predicated region
    $region150: #{tpu_custom_call.1} parent=1 // pred_check
      _
    $region151: #{tpu_custom_call.1} parent=1 // pred_check_branch
      %261 = sbr.rel (0) target = $region153
    $region152: #{tpu_custom_call.1} parent=1 // pred_region
      %262 = dma.done [#allocation24], 3072
    $region153: #{tpu_custom_call.1} parent=1 // pred_fallthru
      _
    %v264 = vld [vmem:[#allocation16] sm:$0x1]
    %v265 = vld [vmem:[#allocation17] sm:$0x1]
    %v266 = vld [vmem:[#allocation2] sm:$0xff]
    %v267 = vld [vmem:[#allocation2 + $0x8] sm:$0xf]
    %v268 = vld [vmem:[%s1] sm:$0xff]
    %v269 = vld [vmem:[%s2] sm:$0xff]
    %v270 = vld [vmem:[%s3] sm:$0xff]
    %v271 = vld [vmem:[%s4] sm:$0xff]
    %v272 = vld [vmem:[#allocation5] sm:$0xff]
    %v273 = vld [vmem:[#allocation8] sm:$0xf]
    %v274 = vld [vmem:[#allocation8 + $0x4] sm:$0xf]
    %v275 = vld [vmem:[#allocation8 + $0x8] sm:$0xf]
    %v276 = vld [vmem:[#allocation8 + $0xc] sm:$0xf]
    %v277 = vld [vmem:[#allocation8 + $0x10] sm:$0xf]
    %v278 = vld [vmem:[#allocation8 + $0x14] sm:$0xf]
    %v279 = vld [vmem:[#allocation8 + $0x18] sm:$0xf]
    %v280 = vld [vmem:[#allocation8 + $0x1c] sm:$0xf]
    %v281 = vld [vmem:[#allocation8 + $0x20] sm:$0xf]
    %v282 = vld [vmem:[#allocation8 + $0x24] sm:$0xf]
    %v283 = vld [vmem:[#allocation8 + $0x28] sm:$0xf]
    %v284 = vld [vmem:[#allocation8 + $0x2c] sm:$0xf]
    %v285 = vld [vmem:[#allocation8 + $0x30] sm:$0xf]
    %v286 = vld [vmem:[#allocation8 + $0x34] sm:$0xf]
    %v287 = vld [vmem:[#allocation8 + $0x38] sm:$0xf]
    %v288 = vld [vmem:[#allocation8 + $0x3c] sm:$0xf]
    %v289 = vld [vmem:[#allocation8 + $0x40] sm:$0xf]
    %v290 = vld [vmem:[#allocation8 + $0x44] sm:$0xf]
    %v291 = vld [vmem:[#allocation8 + $0x48] sm:$0xf]
    %v292 = vld [vmem:[#allocation8 + $0x4c] sm:$0xf]
    %v293 = vld [vmem:[#allocation8 + $0x50] sm:$0xf]
    %v294 = vld [vmem:[#allocation8 + $0x54] sm:$0xf]
    %v295 = vld [vmem:[#allocation8 + $0x58] sm:$0xf]
    %v296 = vld [vmem:[#allocation8 + $0x5c] sm:$0xf]
    %v297 = vld [vmem:[#allocation8 + $0x60] sm:$0xf]
    %v298 = vld [vmem:[#allocation8 + $0x64] sm:$0xf]
    %v299 = vld [vmem:[#allocation8 + $0x68] sm:$0xf]
    %v300 = vld [vmem:[#allocation8 + $0x6c] sm:$0xf]
    %v301 = vld [vmem:[#allocation8 + $0x70] sm:$0xf]
    %v302 = vld [vmem:[#allocation8 + $0x74] sm:$0xf]
    %v303 = vld [vmem:[#allocation8 + $0x78] sm:$0xf]
    %v304 = vld [vmem:[#allocation8 + $0x7c] sm:$0xf]
    %v305 = vld [vmem:[#allocation8 + $0x80] sm:$0xf]
    %v306 = vld [vmem:[#allocation8 + $0x84] sm:$0xf]
    %v307 = vld [vmem:[#allocation8 + $0x88] sm:$0xf]
    %v308 = vld [vmem:[#allocation8 + $0x8c] sm:$0xf]
    %v309 = vld [vmem:[#allocation8 + $0x90] sm:$0xf]
    %v310 = vld [vmem:[#allocation8 + $0x94] sm:$0xf]
    %v311 = vld [vmem:[#allocation8 + $0x98] sm:$0xf]
    %v312 = vld [vmem:[#allocation8 + $0x9c] sm:$0xf]
    %v313 = vld [vmem:[#allocation8 + $0xa0] sm:$0xf]
    %v314 = vld [vmem:[#allocation8 + $0xa4] sm:$0xf]
    %v315 = vld [vmem:[#allocation8 + $0xa8] sm:$0xf]
    %v316 = vld [vmem:[#allocation8 + $0xac] sm:$0xf]
    %v317 = vld [vmem:[#allocation8 + $0xb0] sm:$0xf]
    %v318 = vld [vmem:[#allocation8 + $0xb4] sm:$0xf]
    %v319 = vld [vmem:[#allocation8 + $0xb8] sm:$0xf]
    %v320 = vld [vmem:[#allocation8 + $0xbc] sm:$0xf]
    %v321 = vld [vmem:[#allocation10] sm:$0x1]
    %v323 = vlaneseq
    %v324 = vshrl.u32 %v323, 7
    %v325 = vsub.s32 0, %v324
    %v326 = vrot.slane %v321, %v325
    %v330 = vunpack.c.l.b16 %v266
    %v331 = vunpack.c.h.b16 %v266
    %v332 = vunpack.c.l.b16 %v267
    %v333 = vpack.c.b16 %v330, %v330
    %v334 = vpack.c.b16 %v331, %v331
    %v335 = vpack.c.b16 %v332, %v332
    %v387 = vunpack.c.l.b16 %v273
    %v388 = vunpack.c.l.b16 %v274
    %v389 = vunpack.c.l.b16 %v275
    %v390 = vunpack.c.l.b16 %v276
    %v391 = vunpack.c.l.b16 %v277
    %v392 = vunpack.c.l.b16 %v278
    %v393 = vunpack.c.l.b16 %v279
    %v394 = vunpack.c.l.b16 %v280
    %v395 = vunpack.c.l.b16 %v281
    %v396 = vunpack.c.l.b16 %v282
    %v397 = vunpack.c.l.b16 %v283
    %v398 = vunpack.c.l.b16 %v284
    %v399 = vunpack.c.l.b16 %v285
    %v400 = vunpack.c.l.b16 %v286
    %v401 = vunpack.c.l.b16 %v287
    %v402 = vunpack.c.l.b16 %v288
    %v403 = vunpack.c.l.b16 %v289
    %v404 = vunpack.c.l.b16 %v290
    %v405 = vunpack.c.l.b16 %v291
    %v406 = vunpack.c.l.b16 %v292
    %v407 = vunpack.c.l.b16 %v293
    %v408 = vunpack.c.l.b16 %v294
    %v409 = vunpack.c.l.b16 %v295
    %v410 = vunpack.c.l.b16 %v296
    %v411 = vunpack.c.l.b16 %v297
    %v412 = vunpack.c.l.b16 %v298
    %v413 = vunpack.c.l.b16 %v299
    %v414 = vunpack.c.l.b16 %v300
    %v415 = vunpack.c.l.b16 %v301
    %v416 = vunpack.c.l.b16 %v302
    %v417 = vunpack.c.l.b16 %v303
    %v418 = vunpack.c.l.b16 %v304
    %v419 = vunpack.c.l.b16 %v305
    %v420 = vunpack.c.l.b16 %v306
    %v421 = vunpack.c.l.b16 %v307
    %v422 = vunpack.c.l.b16 %v308
    %v423 = vunpack.c.l.b16 %v309
    %v424 = vunpack.c.l.b16 %v310
    %v425 = vunpack.c.l.b16 %v311
    %v426 = vunpack.c.l.b16 %v312
    %v427 = vunpack.c.l.b16 %v313
    %v428 = vunpack.c.l.b16 %v314
    %v429 = vunpack.c.l.b16 %v315
    %v430 = vunpack.c.l.b16 %v316
    %v431 = vunpack.c.l.b16 %v317
    %v432 = vunpack.c.l.b16 %v318
    %v433 = vunpack.c.l.b16 %v319
    %v434 = vunpack.c.l.b16 %v320
    %v435 = vpack.c.b16 %v388, %v387
    %v436 = vpack.c.b16 %v390, %v389
    %v437 = vpack.c.b16 %v392, %v391
    %v438 = vpack.c.b16 %v394, %v393
    %v439 = vpack.c.b16 %v396, %v395
    %v440 = vpack.c.b16 %v398, %v397
    %v441 = vpack.c.b16 %v400, %v399
    %v442 = vpack.c.b16 %v402, %v401
    %v443 = vpack.c.b16 %v404, %v403
    %v444 = vpack.c.b16 %v406, %v405
    %v445 = vpack.c.b16 %v408, %v407
    %v446 = vpack.c.b16 %v410, %v409
    %v447 = vpack.c.b16 %v412, %v411
    %v448 = vpack.c.b16 %v414, %v413
    %v449 = vpack.c.b16 %v416, %v415
    %v450 = vpack.c.b16 %v418, %v417
    %v451 = vpack.c.b16 %v420, %v419
    %v452 = vpack.c.b16 %v422, %v421
    %v453 = vpack.c.b16 %v424, %v423
    %v454 = vpack.c.b16 %v426, %v425
    %v455 = vpack.c.b16 %v428, %v427
    %v456 = vpack.c.b16 %v430, %v429
    %v457 = vpack.c.b16 %v432, %v431
    %v458 = vpack.c.b16 %v434, %v433
    %483 = vmatprep.subr.bf16.mxu0 0
    %484 = vmatpush1.bf16.msra.mxu0 %v442
    %485 = vmatprep.subr.bf16.mxu0 0
    %486 = vmatpush1.bf16.msra.mxu0 %v441
    %487 = vmatprep.subr.bf16.mxu0 0
    %488 = vmatpush1.bf16.msra.mxu0 %v440
    %489 = vmatprep.subr.bf16.mxu0 0
    %490 = vmatpush1.bf16.msra.mxu0 %v439
    %491 = vmatprep.subr.bf16.mxu0 0
    %492 = vmatpush1.bf16.msra.mxu0 %v438
    %493 = vmatprep.subr.bf16.mxu0 0
    %494 = vmatpush1.bf16.msra.mxu0 %v437
    %495 = vmatprep.subr.bf16.mxu0 0
    %496 = vmatpush1.bf16.msra.mxu0 %v436
    %497 = vmatprep.subr.bf16.mxu0 0
    %498 = vmatpush1.bf16.msra.mxu0 %v435
    %499 = vmatprep.subr.bf16.mxu0 0
    %500 = vmatpush2.bf16.msra.mxu0 %v450
    %501 = vmatprep.subr.bf16.mxu0 0
    %502 = vmatpush2.bf16.msra.mxu0 %v449
    %503 = vmatprep.subr.bf16.mxu0 0
    %504 = vmatpush2.bf16.msra.mxu0 %v448
    %505 = vmatprep.subr.bf16.mxu0 0
    %506 = vmatpush2.bf16.msra.mxu0 %v447
    %507 = vmatprep.subr.bf16.mxu0 0
    %508 = vmatpush2.bf16.msra.mxu0 %v446
    %509 = vmatprep.subr.bf16.mxu0 0
    %510 = vmatpush2.bf16.msra.mxu0 %v445
    %511 = vmatprep.subr.bf16.mxu0 0
    %512 = vmatpush2.bf16.msra.mxu0 %v444
    %513 = vmatprep.subr.bf16.mxu0 0
    %514 = vmatpush2.bf16.msra.mxu0 %v443
    %515 = vmatprep.mubr.bf16.mxu0 %v334
    %516 = vmatmul.mubr.bf16.gmra.mxu0 %v333
    %v517 = vpop.f32.mrf.mxu0
    %v518 = vadd.f32 %v326, %v517
    %v519 = vpop.f32.mrf.mxu0
    %v520 = vpop.f32.mrf.mxu0
    %v521 = vpop.f32.mrf.mxu0
    %522 = vdwg.mxu0
    %523 = vmatprep.subr.bf16.mxu0 0
    %524 = vmatpush1.bf16.msra.mxu0 %v458
    %525 = vmatprep.subr.bf16.mxu0 0
    %526 = vmatpush1.bf16.msra.mxu0 %v457
    %527 = vmatprep.subr.bf16.mxu0 0
    %528 = vmatpush1.bf16.msra.mxu0 %v456
    %529 = vmatprep.subr.bf16.mxu0 0
    %530 = vmatpush1.bf16.msra.mxu0 %v455
    %531 = vmatprep.subr.bf16.mxu0 0
    %532 = vmatpush1.bf16.msra.mxu0 %v454
    %533 = vmatprep.subr.bf16.mxu0 0
    %534 = vmatpush1.bf16.msra.mxu0 %v453
    %535 = vmatprep.subr.bf16.mxu0 0
    %536 = vmatpush1.bf16.msra.mxu0 %v452
    %537 = vmatprep.subr.bf16.mxu0 0
    %538 = vmatpush1.bf16.msra.mxu0 %v451
    %539 = vmatprep.subr.bf16.mxu0 0
    %540 = vmatpush2.bf16.msra.mxu0 0
    %541 = vmatprep.subr.bf16.mxu0 0
    %542 = vmatpush2.bf16.msra.mxu0 0
    %543 = vmatprep.subr.bf16.mxu0 0
    %544 = vmatpush2.bf16.msra.mxu0 0
    %545 = vmatprep.subr.bf16.mxu0 0
    %546 = vmatpush2.bf16.msra.mxu0 0
    %547 = vmatprep.subr.bf16.mxu0 0
    %548 = vmatpush2.bf16.msra.mxu0 0
    %549 = vmatprep.subr.bf16.mxu0 0
    %550 = vmatpush2.bf16.msra.mxu0 0
    %551 = vmatprep.subr.bf16.mxu0 0
    %552 = vmatpush2.bf16.msra.mxu0 0
    %553 = vmatprep.subr.bf16.mxu0 0
    %554 = vmatpush2.bf16.msra.mxu0 0
    %555 = vmatprep.mubr.bf16.mxu0 0
    %556 = vmatmul.mubr.bf16.gmra.mxu0 %v335
    %v557 = vpop.f32.mrf.mxu0
    %v558 = vadd.f32 %v518, %v557
    %v559 = vpop.f32.mrf.mxu0
    %v560 = vpop.f32.mrf.mxu0
    %v561 = vpop.f32.mrf.mxu0
    %562 = vdwg.mxu0
    %v563 = vmul.f32 %v558, 0.01
    %v564 = vmax.f32 %v558, %v563
    %v565 = vld [vmem:[#allocation7] sm:$0xff]
    %vm566 = vcmp.lt.s32.totalorder %v565, 13421773
    %v567 = vmul.f32 %v564, 1.25
    %v568 = vsel %vm566, %v567, 0.0
    %v569 = vrot.slane %v568, 4
    %v570 = vadd.f32 %v568, %v569
    %v571 = vrot.slane %v570, 2
    %v572 = vadd.f32 %v570, %v571
    %v573 = vrot.slane %v572, 1
    %v574 = vadd.f32 %v572, %v573
    %v575 = vrcp.pop 8.0
    %v576 = vmul.f32 %v574, %v575
    %v577 = vsub.f32 %v568, %v576
    %v578 = vmul.f32 %v577, %v577
    %v579 = vrot.slane %v578, 4
    %v580 = vadd.f32 %v578, %v579
    %v581 = vrot.slane %v580, 2
    %v582 = vadd.f32 %v580, %v581
    %v583 = vrot.slane %v582, 1
    %v584 = vadd.f32 %v582, %v583
    %v585 = vmul.f32 %v584, %v575
    %v586 = vadd.f32 %v585, 1e-05
    %v587 = vrsqrt.pop %v586
    %v588 = vmul.f32 %v587, %v264
    %v589 = vlaneseq
    %v590 = vshrl.u32 %v589, 7
    %v591 = vsub.s32 0, %v590
    %v592 = vrot.slane %v588, %v591
    %v593 = vmul.f32 %v577, %v592
    %v595 = vlaneseq
    %v596 = vshrl.u32 %v595, 7
    %v597 = vsub.s32 0, %v596
    %v598 = vrot.slane %v265, %v597
    %v600 = vadd.f32 %v593, %v598
    %v601 = vpack.c.bf16 %v600, %v600
    %v602 = vld [vmem:[#allocation11] sm:$0xf]
    %v603 = vld [vmem:[#allocation11 + $0x4] sm:$0xf]
    %v604 = vld [vmem:[#allocation11 + $0x8] sm:$0xf]
    %v605 = vld [vmem:[#allocation11 + $0xc] sm:$0xf]
    %v606 = vld [vmem:[#allocation11 + $0x10] sm:$0xf]
    %v607 = vld [vmem:[#allocation11 + $0x14] sm:$0xf]
    %v608 = vld [vmem:[#allocation11 + $0x18] sm:$0xf]
    %v609 = vld [vmem:[#allocation11 + $0x1c] sm:$0xf]
    %v610 = vld [vmem:[#allocation11 + $0x20] sm:$0xf]
    %v611 = vld [vmem:[#allocation11 + $0x24] sm:$0xf]
    %v612 = vld [vmem:[#allocation11 + $0x28] sm:$0xf]
    %v613 = vld [vmem:[#allocation11 + $0x2c] sm:$0xf]
    %v614 = vld [vmem:[#allocation11 + $0x30] sm:$0xf]
    %v615 = vld [vmem:[#allocation11 + $0x34] sm:$0xf]
    %v616 = vld [vmem:[#allocation11 + $0x38] sm:$0xf]
    %v617 = vld [vmem:[#allocation11 + $0x3c] sm:$0xf]
    %v618 = vld [vmem:[#allocation13] sm:$0x3]
    %620 = vset.pattern.permute.xlu0 0
    %621 = vperm.xlu0 %620, %v268
    %v622 = vpop.permute.xlu0 %621
    %v624 = vlaneseq
    %v625 = vshrl.u32 %v624, 7
    %v626 = vsub.s32 0, %v625
    %v627 = vrot.slane %v618, %v626
    %v628 = vmul.f32 %v622, %v627
    %630 = vset.pattern.permute.xlu0 0
    %631 = vperm.xlu0 %630, %v269
    %v632 = vpop.permute.xlu0 %631
    %v634 = vlaneseq
    %v635 = vshrl.u32 %v634, 7
    %v636 = vsub.s32 1, %v635
    %v637 = vrot.slane %v618, %v636
    %v638 = vmul.f32 %v632, %v637
    %v639 = vadd.f32 %v628, %v638
    %v656 = vunpack.c.l.b16 %v602
    %v657 = vunpack.c.l.b16 %v603
    %v658 = vunpack.c.l.b16 %v604
    %v659 = vunpack.c.l.b16 %v605
    %v660 = vunpack.c.l.b16 %v606
    %v661 = vunpack.c.l.b16 %v607
    %v662 = vunpack.c.l.b16 %v608
    %v663 = vunpack.c.l.b16 %v609
    %v664 = vunpack.c.l.b16 %v610
    %v665 = vunpack.c.l.b16 %v611
    %v666 = vunpack.c.l.b16 %v612
    %v667 = vunpack.c.l.b16 %v613
    %v668 = vunpack.c.l.b16 %v614
    %v669 = vunpack.c.l.b16 %v615
    %v670 = vunpack.c.l.b16 %v616
    %v671 = vunpack.c.l.b16 %v617
    %v672 = vpack.c.b16 %v657, %v656
    %v673 = vpack.c.b16 %v659, %v658
    %v674 = vpack.c.b16 %v661, %v660
    %v675 = vpack.c.b16 %v663, %v662
    %v676 = vpack.c.b16 %v665, %v664
    %v677 = vpack.c.b16 %v667, %v666
    %v678 = vpack.c.b16 %v669, %v668
    %v679 = vpack.c.b16 %v671, %v670
    %688 = vmatprep.subr.bf16.mxu0 0
    %689 = vmatpush1.bf16.msra.mxu0 %v679
    %690 = vmatprep.subr.bf16.mxu0 0
    %691 = vmatpush1.bf16.msra.mxu0 %v678
    %692 = vmatprep.subr.bf16.mxu0 0
    %693 = vmatpush1.bf16.msra.mxu0 %v677
    %694 = vmatprep.subr.bf16.mxu0 0
    %695 = vmatpush1.bf16.msra.mxu0 %v676
    %696 = vmatprep.subr.bf16.mxu0 0
    %697 = vmatpush1.bf16.msra.mxu0 %v675
    %698 = vmatprep.subr.bf16.mxu0 0
    %699 = vmatpush1.bf16.msra.mxu0 %v674
    %700 = vmatprep.subr.bf16.mxu0 0
    %701 = vmatpush1.bf16.msra.mxu0 %v673
    %702 = vmatprep.subr.bf16.mxu0 0
    %703 = vmatpush1.bf16.msra.mxu0 %v672
    %704 = vmatprep.subr.bf16.mxu0 0
    %705 = vmatpush2.bf16.msra.mxu0 0
    %706 = vmatprep.subr.bf16.mxu0 0
    %707 = vmatpush2.bf16.msra.mxu0 0
    %708 = vmatprep.subr.bf16.mxu0 0
    %709 = vmatpush2.bf16.msra.mxu0 0
    %710 = vmatprep.subr.bf16.mxu0 0
    %711 = vmatpush2.bf16.msra.mxu0 0
    %712 = vmatprep.subr.bf16.mxu0 0
    %713 = vmatpush2.bf16.msra.mxu0 0
    %714 = vmatprep.subr.bf16.mxu0 0
    %715 = vmatpush2.bf16.msra.mxu0 0
    %716 = vmatprep.subr.bf16.mxu0 0
    %717 = vmatpush2.bf16.msra.mxu0 0
    %718 = vmatprep.subr.bf16.mxu0 0
    %719 = vmatpush2.bf16.msra.mxu0 0
    %720 = vmatprep.mubr.bf16.mxu0 0
    %721 = vmatmul.mubr.bf16.gmra.mxu0 %v601
    %v722 = vpop.f32.mrf.mxu0
    %v723 = vadd.f32 %v639, %v722
    %v724 = vpop.f32.mrf.mxu0
    %v725 = vpop.f32.mrf.mxu0
    %v726 = vpop.f32.mrf.mxu0
    %727 = vdwg.mxu0
    %v728 = vld [vmem:[#allocation14] sm:$0x1]
    %v730 = vlaneseq
    %v731 = vshrl.u32 %v730, 7
    %v732 = vsub.s32 0, %v731
    %v733 = vrot.slane %v728, %v732
    %v735 = vadd.f32 %v723, %v733
    %v736 = vmul.f32 %v735, 0.01
    %v737 = vmax.f32 %v735, %v736
    %s738 = scalar_lea.vmem [#allocation7], 8
    %v739 = vld [vmem:[%s738] sm:$0xff]
    %vm740 = vcmp.lt.s32.totalorder %v739, 13421773
    %v741 = vmul.f32 %v737, 1.25
    %v742 = vsel %vm740, %v741, 0.0
    %v743 = vrot.slane %v742, 4
    %v744 = vadd.f32 %v742, %v743
    %v745 = vrot.slane %v744, 2
    %v746 = vadd.f32 %v744, %v745
    %v747 = vrot.slane %v746, 1
    %v748 = vadd.f32 %v746, %v747
    %v749 = vmul.f32 %v748, %v575
    %v750 = vsub.f32 %v742, %v749
    %v751 = vmul.f32 %v750, %v750
    %v752 = vrot.slane %v751, 4
    %v753 = vadd.f32 %v751, %v752
    %v754 = vrot.slane %v753, 2
    %v755 = vadd.f32 %v753, %v754
    %v756 = vrot.slane %v755, 1
    %v757 = vadd.f32 %v755, %v756
    %v758 = vmul.f32 %v757, %v575
    %v759 = vadd.f32 %v758, 1e-05
    %v760 = vrsqrt.pop %v759
    %v761 = vmul.f32 %v760, %v264
    %v762 = vlaneseq
    %v763 = vshrl.u32 %v762, 7
    %v764 = vsub.s32 0, %v763
    %v765 = vrot.slane %v761, %v764
    %v766 = vmul.f32 %v750, %v765
    %v767 = vadd.f32 %v766, %v598
    %v768 = vpack.c.bf16 %v767, %v767
    %v769 = vld [vmem:[#allocation19] sm:$0xff]
    %v770 = vld [vmem:[#allocation19 + $0x8] sm:$0xff]
    %v771 = vld [vmem:[#allocation19 + $0x10] sm:$0xff]
    %v772 = vld [vmem:[#allocation19 + $0x18] sm:$0xff]
    %v773 = vld [vmem:[#allocation19 + $0x20] sm:$0xff]
    %v774 = vld [vmem:[#allocation19 + $0x28] sm:$0xff]
    %v775 = vld [vmem:[#allocation19 + $0x30] sm:$0xff]
    %v776 = vld [vmem:[#allocation19 + $0x38] sm:$0xff]
    %v777 = vld [vmem:[#allocation19 + $0x40] sm:$0xff]
    %v778 = vld [vmem:[#allocation19 + $0x48] sm:$0xff]
    %v779 = vld [vmem:[#allocation19 + $0x50] sm:$0xff]
    %v780 = vld [vmem:[#allocation19 + $0x58] sm:$0xff]
    %v781 = vld [vmem:[#allocation19 + $0x60] sm:$0xff]
    %v782 = vld [vmem:[#allocation19 + $0x68] sm:$0xff]
    %v783 = vld [vmem:[#allocation19 + $0x70] sm:$0xff]
    %v784 = vld [vmem:[#allocation19 + $0x78] sm:$0xff]
    %v785 = vld [vmem:[#allocation20] sm:$0x3]
    %v787 = vlaneseq
    %v788 = vshrl.u32 %v787, 7
    %v789 = vsub.s32 0, %v788
    %v790 = vrot.slane %v785, %v789
    %v791 = vlaneseq
    %v792 = vshrl.u32 %v791, 7
    %v793 = vsub.s32 1, %v792
    %v794 = vrot.slane %v785, %v793
    %v813 = vunpack.c.l.b16 %v769
    %v814 = vunpack.c.h.b16 %v769
    %v815 = vunpack.c.l.b16 %v770
    %v816 = vunpack.c.h.b16 %v770
    %v817 = vunpack.c.l.b16 %v771
    %v818 = vunpack.c.h.b16 %v771
    %v819 = vunpack.c.l.b16 %v772
    %v820 = vunpack.c.h.b16 %v772
    %v821 = vunpack.c.l.b16 %v773
    %v822 = vunpack.c.h.b16 %v773
    %v823 = vunpack.c.l.b16 %v774
    %v824 = vunpack.c.h.b16 %v774
    %v825 = vunpack.c.l.b16 %v775
    %v826 = vunpack.c.h.b16 %v775
    %v827 = vunpack.c.l.b16 %v776
    %v828 = vunpack.c.h.b16 %v776
    %v829 = vunpack.c.l.b16 %v777
    %v830 = vunpack.c.h.b16 %v777
    %v831 = vunpack.c.l.b16 %v778
    %v832 = vunpack.c.h.b16 %v778
    %v833 = vunpack.c.l.b16 %v779
    %v834 = vunpack.c.h.b16 %v779
    %v835 = vunpack.c.l.b16 %v780
    %v836 = vunpack.c.h.b16 %v780
    %v837 = vunpack.c.l.b16 %v781
    %v838 = vunpack.c.h.b16 %v781
    %v839 = vunpack.c.l.b16 %v782
    %v840 = vunpack.c.h.b16 %v782
    %v841 = vunpack.c.l.b16 %v783
    %v842 = vunpack.c.h.b16 %v783
    %v843 = vunpack.c.l.b16 %v784
    %v844 = vunpack.c.h.b16 %v784
    %v845 = vpack.c.b16 %v815, %v813
    %v846 = vpack.c.b16 %v816, %v814
    %v847 = vpack.c.b16 %v819, %v817
    %v848 = vpack.c.b16 %v820, %v818
    %v849 = vpack.c.b16 %v823, %v821
    %v850 = vpack.c.b16 %v824, %v822
    %v851 = vpack.c.b16 %v827, %v825
    %v852 = vpack.c.b16 %v828, %v826
    %v853 = vpack.c.b16 %v831, %v829
    %v854 = vpack.c.b16 %v832, %v830
    %v855 = vpack.c.b16 %v835, %v833
    %v856 = vpack.c.b16 %v836, %v834
    %v857 = vpack.c.b16 %v839, %v837
    %v858 = vpack.c.b16 %v840, %v838
    %v859 = vpack.c.b16 %v843, %v841
    %v860 = vpack.c.b16 %v844, %v842
    %877 = vmatprep.subr.bf16.mxu0 %v860
    %878 = vmatpush1.bf16.msra.mxu0 %v859
    %879 = vmatprep.subr.bf16.mxu0 %v858
    %880 = vmatpush1.bf16.msra.mxu0 %v857
    %881 = vmatprep.subr.bf16.mxu0 %v856
    %882 = vmatpush1.bf16.msra.mxu0 %v855
    %883 = vmatprep.subr.bf16.mxu0 %v854
    %884 = vmatpush1.bf16.msra.mxu0 %v853
    %885 = vmatprep.subr.bf16.mxu0 %v852
    %886 = vmatpush1.bf16.msra.mxu0 %v851
    %887 = vmatprep.subr.bf16.mxu0 %v850
    %888 = vmatpush1.bf16.msra.mxu0 %v849
    %889 = vmatprep.subr.bf16.mxu0 %v848
    %890 = vmatpush1.bf16.msra.mxu0 %v847
    %891 = vmatprep.subr.bf16.mxu0 %v846
    %892 = vmatpush1.bf16.msra.mxu0 %v845
    %893 = vmatprep.subr.bf16.mxu0 0
    %894 = vmatpush2.bf16.msra.mxu0 0
    %895 = vmatprep.subr.bf16.mxu0 0
    %896 = vmatpush2.bf16.msra.mxu0 0
    %897 = vmatprep.subr.bf16.mxu0 0
    %898 = vmatpush2.bf16.msra.mxu0 0
    %899 = vmatprep.subr.bf16.mxu0 0
    %900 = vmatpush2.bf16.msra.mxu0 0
    %901 = vmatprep.subr.bf16.mxu0 0
    %902 = vmatpush2.bf16.msra.mxu0 0
    %903 = vmatprep.subr.bf16.mxu0 0
    %904 = vmatpush2.bf16.msra.mxu0 0
    %905 = vmatprep.subr.bf16.mxu0 0
    %906 = vmatpush2.bf16.msra.mxu0 0
    %907 = vmatprep.subr.bf16.mxu0 0
    %908 = vmatpush2.bf16.msra.mxu0 0
    %909 = vmatprep.mubr.bf16.mxu0 0
    %910 = vmatmul.mubr.bf16.gmra.mxu0 %v768
    %v911 = vpop.f32.mrf.mxu0
    %v912 = vadd.f32 %v790, %v911
    %v913 = vpop.f32.mrf.mxu0
    %v914 = vadd.f32 %v794, %v913
    %v915 = vpop.f32.mrf.mxu0
    %v916 = vpop.f32.mrf.mxu0
    %917 = vdwg.mxu0
    %918 = vst [vmem:[#allocation27] sm:$0xff] %v912
    %919 = vst [vmem:[#allocation27 + $0x8] sm:$0xff] %v914
    %v920 = vmul.f32 %v914, 0.5
    %v921 = vmul.f32 %v920, 1.442695
    %v922 = vpow.pop %v921
    %v923 = vmul.f32 %v272, %v922
    %v924 = vadd.f32 %v912, %v923
    %v925 = vpack.c.bf16 %v924, %v924
    %v926 = vld [vmem:[%s16] sm:$0xf]
    %v927 = vld [vmem:[%s16 + $0x4] sm:$0xf]
    %v928 = vld [vmem:[%s16 + $0x8] sm:$0xf]
    %v929 = vld [vmem:[%s16 + $0xc] sm:$0xf]
    %v930 = vld [vmem:[%s16 + $0x10] sm:$0xf]
    %v931 = vld [vmem:[%s16 + $0x14] sm:$0xf]
    %v932 = vld [vmem:[%s16 + $0x18] sm:$0xf]
    %v933 = vld [vmem:[%s16 + $0x1c] sm:$0xf]
    %v934 = vld [vmem:[%s16 + $0x20] sm:$0xf]
    %v935 = vld [vmem:[%s16 + $0x24] sm:$0xf]
    %v936 = vld [vmem:[%s16 + $0x28] sm:$0xf]
    %v937 = vld [vmem:[%s16 + $0x2c] sm:$0xf]
    %v938 = vld [vmem:[%s16 + $0x30] sm:$0xf]
    %v939 = vld [vmem:[%s16 + $0x34] sm:$0xf]
    %v940 = vld [vmem:[%s16 + $0x38] sm:$0xf]
    %v941 = vld [vmem:[%s16 + $0x3c] sm:$0xf]
    %v942 = vld [vmem:[#allocation22] sm:$0x1]
    %v944 = vlaneseq
    %v945 = vshrl.u32 %v944, 7
    %v946 = vsub.s32 0, %v945
    %v947 = vrot.slane %v942, %v946
    %v965 = vunpack.c.l.b16 %v926
    %v966 = vunpack.c.l.b16 %v927
    %v967 = vunpack.c.l.b16 %v928
    %v968 = vunpack.c.l.b16 %v929
    %v969 = vunpack.c.l.b16 %v930
    %v970 = vunpack.c.l.b16 %v931
    %v971 = vunpack.c.l.b16 %v932
    %v972 = vunpack.c.l.b16 %v933
    %v973 = vunpack.c.l.b16 %v934
    %v974 = vunpack.c.l.b16 %v935
    %v975 = vunpack.c.l.b16 %v936
    %v976 = vunpack.c.l.b16 %v937
    %v977 = vunpack.c.l.b16 %v938
    %v978 = vunpack.c.l.b16 %v939
    %v979 = vunpack.c.l.b16 %v940
    %v980 = vunpack.c.l.b16 %v941
    %v981 = vpack.c.b16 %v966, %v965
    %v982 = vpack.c.b16 %v968, %v967
    %v983 = vpack.c.b16 %v970, %v969
    %v984 = vpack.c.b16 %v972, %v971
    %v985 = vpack.c.b16 %v974, %v973
    %v986 = vpack.c.b16 %v976, %v975
    %v987 = vpack.c.b16 %v978, %v977
    %v988 = vpack.c.b16 %v980, %v979
    %997 = vmatprep.subr.bf16.mxu0 0
    %998 = vmatpush1.bf16.msra.mxu0 %v988
    %999 = vmatprep.subr.bf16.mxu0 0
    %1000 = vmatpush1.bf16.msra.mxu0 %v987
    %1001 = vmatprep.subr.bf16.mxu0 0
    %1002 = vmatpush1.bf16.msra.mxu0 %v986
    %1003 = vmatprep.subr.bf16.mxu0 0
    %1004 = vmatpush1.bf16.msra.mxu0 %v985
    %1005 = vmatprep.subr.bf16.mxu0 0
    %1006 = vmatpush1.bf16.msra.mxu0 %v984
    %1007 = vmatprep.subr.bf16.mxu0 0
    %1008 = vmatpush1.bf16.msra.mxu0 %v983
    %1009 = vmatprep.subr.bf16.mxu0 0
    %1010 = vmatpush1.bf16.msra.mxu0 %v982
    %1011 = vmatprep.subr.bf16.mxu0 0
    %1012 = vmatpush1.bf16.msra.mxu0 %v981
    %1013 = vmatprep.subr.bf16.mxu0 0
    %1014 = vmatpush2.bf16.msra.mxu0 0
    %1015 = vmatprep.subr.bf16.mxu0 0
    %1016 = vmatpush2.bf16.msra.mxu0 0
    %1017 = vmatprep.subr.bf16.mxu0 0
    %1018 = vmatpush2.bf16.msra.mxu0 0
    %1019 = vmatprep.subr.bf16.mxu0 0
    %1020 = vmatpush2.bf16.msra.mxu0 0
    %1021 = vmatprep.subr.bf16.mxu0 0
    %1022 = vmatpush2.bf16.msra.mxu0 0
    %1023 = vmatprep.subr.bf16.mxu0 0
    %1024 = vmatpush2.bf16.msra.mxu0 0
    %1025 = vmatprep.subr.bf16.mxu0 0
    %1026 = vmatpush2.bf16.msra.mxu0 0
    %1027 = vmatprep.subr.bf16.mxu0 0
    %1028 = vmatpush2.bf16.msra.mxu0 0
    %1029 = vmatprep.mubr.bf16.mxu0 0
    %1030 = vmatmul.mubr.bf16.gmra.mxu0 %v925
    %v1031 = vpop.f32.mrf.mxu0
    %v1032 = vadd.f32 %v947, %v1031
    %v1033 = vpop.f32.mrf.mxu0
    %v1034 = vpop.f32.mrf.mxu0
    %v1035 = vpop.f32.mrf.mxu0
    %1036 = vdwg.mxu0
    %v1037 = vmul.f32 %v1032, 0.01
    %v1038 = vmax.f32 %v1032, %v1037
    %s1039 = scalar_lea.vmem [#allocation7], 16
    %v1040 = vld [vmem:[%s1039] sm:$0xff]
    %vm1041 = vcmp.lt.s32.totalorder %v1040, 13421773
    %v1042 = vmul.f32 %v1038, 1.25
    %v1043 = vsel %vm1041, %v1042, 0.0
    %v1044 = vrot.slane %v1043, 4
    %v1045 = vadd.f32 %v1043, %v1044
    %v1046 = vrot.slane %v1045, 2
    %v1047 = vadd.f32 %v1045, %v1046
    %v1048 = vrot.slane %v1047, 1
    %v1049 = vadd.f32 %v1047, %v1048
    %v1050 = vmul.f32 %v1049, %v575
    %v1051 = vsub.f32 %v1043, %v1050
    %v1052 = vmul.f32 %v1051, %v1051
    %v1053 = vrot.slane %v1052, 4
    %v1054 = vadd.f32 %v1052, %v1053
    %v1055 = vrot.slane %v1054, 2
    %v1056 = vadd.f32 %v1054, %v1055
    %v1057 = vrot.slane %v1056, 1
    %v1058 = vadd.f32 %v1056, %v1057
    %v1059 = vmul.f32 %v1058, %v575
    %v1060 = vadd.f32 %v1059, 1e-05
    %v1061 = vrsqrt.pop %v1060
    %v1062 = vmul.f32 %v1061, %v264
    %v1063 = vlaneseq
    %v1064 = vshrl.u32 %v1063, 7
    %v1065 = vsub.s32 0, %v1064
    %v1066 = vrot.slane %v1062, %v1065
    %v1067 = vmul.f32 %v1051, %v1066
    %v1068 = vadd.f32 %v1067, %v598
    %v1069 = vpack.c.bf16 %v1068, %v1068
    %v1070 = vld [vmem:[#allocation23] sm:$0xf]
    %v1071 = vld [vmem:[#allocation23 + $0x4] sm:$0xf]
    %v1072 = vld [vmem:[#allocation23 + $0x8] sm:$0xf]
    %v1073 = vld [vmem:[#allocation23 + $0xc] sm:$0xf]
    %v1074 = vld [vmem:[#allocation23 + $0x10] sm:$0xf]
    %v1075 = vld [vmem:[#allocation23 + $0x14] sm:$0xf]
    %v1076 = vld [vmem:[#allocation23 + $0x18] sm:$0xf]
    %v1077 = vld [vmem:[#allocation23 + $0x1c] sm:$0xf]
    %v1078 = vld [vmem:[#allocation23 + $0x20] sm:$0xf]
    %v1079 = vld [vmem:[#allocation23 + $0x24] sm:$0xf]
    %v1080 = vld [vmem:[#allocation23 + $0x28] sm:$0xf]
    %v1081 = vld [vmem:[#allocation23 + $0x2c] sm:$0xf]
    %v1082 = vld [vmem:[#allocation23 + $0x30] sm:$0xf]
    %v1083 = vld [vmem:[#allocation23 + $0x34] sm:$0xf]
    %v1084 = vld [vmem:[#allocation23 + $0x38] sm:$0xf]
    %v1085 = vld [vmem:[#allocation23 + $0x3c] sm:$0xf]
    %v1086 = vld [vmem:[%s19] sm:$0x3]
    %1088 = vset.pattern.permute.xlu0 0
    %1089 = vperm.xlu0 %1088, %v270
    %v1090 = vpop.permute.xlu0 %1089
    %v1092 = vlaneseq
    %v1093 = vshrl.u32 %v1092, 7
    %v1094 = vsub.s32 0, %v1093
    %v1095 = vrot.slane %v1086, %v1094
    %v1096 = vmul.f32 %v1090, %v1095
    %1098 = vset.pattern.permute.xlu0 0
    %1099 = vperm.xlu0 %1098, %v271
    %v1100 = vpop.permute.xlu0 %1099
    %v1102 = vlaneseq
    %v1103 = vshrl.u32 %v1102, 7
    %v1104 = vsub.s32 1, %v1103
    %v1105 = vrot.slane %v1086, %v1104
    %v1106 = vmul.f32 %v1100, %v1105
    %v1107 = vadd.f32 %v1096, %v1106
    %v1124 = vunpack.c.l.b16 %v1070
    %v1125 = vunpack.c.l.b16 %v1071
    %v1126 = vunpack.c.l.b16 %v1072
    %v1127 = vunpack.c.l.b16 %v1073
    %v1128 = vunpack.c.l.b16 %v1074
    %v1129 = vunpack.c.l.b16 %v1075
    %v1130 = vunpack.c.l.b16 %v1076
    %v1131 = vunpack.c.l.b16 %v1077
    %v1132 = vunpack.c.l.b16 %v1078
    %v1133 = vunpack.c.l.b16 %v1079
    %v1134 = vunpack.c.l.b16 %v1080
    %v1135 = vunpack.c.l.b16 %v1081
    %v1136 = vunpack.c.l.b16 %v1082
    %v1137 = vunpack.c.l.b16 %v1083
    %v1138 = vunpack.c.l.b16 %v1084
    %v1139 = vunpack.c.l.b16 %v1085
    %v1140 = vpack.c.b16 %v1125, %v1124
    %v1141 = vpack.c.b16 %v1127, %v1126
    %v1142 = vpack.c.b16 %v1129, %v1128
    %v1143 = vpack.c.b16 %v1131, %v1130
    %v1144 = vpack.c.b16 %v1133, %v1132
    %v1145 = vpack.c.b16 %v1135, %v1134
    %v1146 = vpack.c.b16 %v1137, %v1136
    %v1147 = vpack.c.b16 %v1139, %v1138
    %1156 = vmatprep.subr.bf16.mxu0 0
    %1157 = vmatpush1.bf16.msra.mxu0 %v1147
    %1158 = vmatprep.subr.bf16.mxu0 0
    %1159 = vmatpush1.bf16.msra.mxu0 %v1146
    %1160 = vmatprep.subr.bf16.mxu0 0
    %1161 = vmatpush1.bf16.msra.mxu0 %v1145
    %1162 = vmatprep.subr.bf16.mxu0 0
    %1163 = vmatpush1.bf16.msra.mxu0 %v1144
    %1164 = vmatprep.subr.bf16.mxu0 0
    %1165 = vmatpush1.bf16.msra.mxu0 %v1143
    %1166 = vmatprep.subr.bf16.mxu0 0
    %1167 = vmatpush1.bf16.msra.mxu0 %v1142
    %1168 = vmatprep.subr.bf16.mxu0 0
    %1169 = vmatpush1.bf16.msra.mxu0 %v1141
    %1170 = vmatprep.subr.bf16.mxu0 0
    %1171 = vmatpush1.bf16.msra.mxu0 %v1140
    %1172 = vmatprep.subr.bf16.mxu0 0
    %1173 = vmatpush2.bf16.msra.mxu0 0
    %1174 = vmatprep.subr.bf16.mxu0 0
    %1175 = vmatpush2.bf16.msra.mxu0 0
    %1176 = vmatprep.subr.bf16.mxu0 0
    %1177 = vmatpush2.bf16.msra.mxu0 0
    %1178 = vmatprep.subr.bf16.mxu0 0
    %1179 = vmatpush2.bf16.msra.mxu0 0
    %1180 = vmatprep.subr.bf16.mxu0 0
    %1181 = vmatpush2.bf16.msra.mxu0 0
    %1182 = vmatprep.subr.bf16.mxu0 0
    %1183 = vmatpush2.bf16.msra.mxu0 0
    %1184 = vmatprep.subr.bf16.mxu0 0
    %1185 = vmatpush2.bf16.msra.mxu0 0
    %1186 = vmatprep.subr.bf16.mxu0 0
    %1187 = vmatpush2.bf16.msra.mxu0 0
    %1188 = vmatprep.mubr.bf16.mxu0 0
    %1189 = vmatmul.mubr.bf16.gmra.mxu0 %v1069
    %v1190 = vpop.f32.mrf.mxu0
    %v1191 = vadd.f32 %v1107, %v1190
    %v1192 = vpop.f32.mrf.mxu0
    %v1193 = vpop.f32.mrf.mxu0
    %v1194 = vpop.f32.mrf.mxu0
    %1195 = vdwg.mxu0
    %v1196 = vld [vmem:[%s20] sm:$0x1]
    %v1198 = vlaneseq
    %v1199 = vshrl.u32 %v1198, 7
    %v1200 = vsub.s32 0, %v1199
    %v1201 = vrot.slane %v1196, %v1200
    %v1203 = vadd.f32 %v1191, %v1201
    %v1204 = vmul.f32 %v1203, 0.01
    %v1205 = vmax.f32 %v1203, %v1204
    %s1206 = scalar_lea.vmem [#allocation7], 24
    %v1207 = vld [vmem:[%s1206] sm:$0xff]
    %vm1208 = vcmp.lt.s32.totalorder %v1207, 13421773
    %v1209 = vmul.f32 %v1205, 1.25
    %v1210 = vsel %vm1208, %v1209, 0.0
    %v1211 = vrot.slane %v1210, 4
    %v1212 = vadd.f32 %v1210, %v1211
    %v1213 = vrot.slane %v1212, 2
    %v1214 = vadd.f32 %v1212, %v1213
    %v1215 = vrot.slane %v1214, 1
    %v1216 = vadd.f32 %v1214, %v1215
    %v1217 = vmul.f32 %v1216, %v575
    %v1218 = vsub.f32 %v1210, %v1217
    %v1219 = vmul.f32 %v1218, %v1218
    %v1220 = vrot.slane %v1219, 4
    %v1221 = vadd.f32 %v1219, %v1220
    %v1222 = vrot.slane %v1221, 2
    %v1223 = vadd.f32 %v1221, %v1222
    %v1224 = vrot.slane %v1223, 1
    %v1225 = vadd.f32 %v1223, %v1224
    %v1226 = vmul.f32 %v1225, %v575
    %v1227 = vadd.f32 %v1226, 1e-05
    %v1228 = vrsqrt.pop %v1227
    %v1229 = vmul.f32 %v1228, %v264
    %v1230 = vlaneseq
    %v1231 = vshrl.u32 %v1230, 7
    %v1232 = vsub.s32 0, %v1231
    %v1233 = vrot.slane %v1229, %v1232
    %v1234 = vmul.f32 %v1218, %v1233
    %v1235 = vadd.f32 %v1234, %v598
    %v1236 = vpack.c.bf16 %v1235, %v1235
    %v1237 = vld [vmem:[#allocation25] sm:$0xff]
    %v1238 = vld [vmem:[#allocation25 + $0x8] sm:$0xf]
    %v1239 = vld [vmem:[#allocation25 + $0xc] sm:$0xff]
    %v1240 = vld [vmem:[#allocation25 + $0x14] sm:$0xf]
    %v1241 = vld [vmem:[#allocation25 + $0x18] sm:$0xff]
    %v1242 = vld [vmem:[#allocation25 + $0x20] sm:$0xf]
    %v1243 = vld [vmem:[#allocation25 + $0x24] sm:$0xff]
    %v1244 = vld [vmem:[#allocation25 + $0x2c] sm:$0xf]
    %v1245 = vld [vmem:[#allocation25 + $0x30] sm:$0xff]
    %v1246 = vld [vmem:[#allocation25 + $0x38] sm:$0xf]
    %v1247 = vld [vmem:[#allocation25 + $0x3c] sm:$0xff]
    %v1248 = vld [vmem:[#allocation25 + $0x44] sm:$0xf]
    %v1249 = vld [vmem:[#allocation25 + $0x48] sm:$0xff]
    %v1250 = vld [vmem:[#allocation25 + $0x50] sm:$0xf]
    %v1251 = vld [vmem:[#allocation25 + $0x54] sm:$0xff]
    %v1252 = vld [vmem:[#allocation25 + $0x5c] sm:$0xf]
    %v1253 = vld [vmem:[#allocation25 + $0x60] sm:$0xff]
    %v1254 = vld [vmem:[#allocation25 + $0x68] sm:$0xf]
    %v1255 = vld [vmem:[#allocation25 + $0x6c] sm:$0xff]
    %v1256 = vld [vmem:[#allocation25 + $0x74] sm:$0xf]
    %v1257 = vld [vmem:[#allocation25 + $0x78] sm:$0xff]
    %v1258 = vld [vmem:[#allocation25 + $0x80] sm:$0xf]
    %v1259 = vld [vmem:[#allocation25 + $0x84] sm:$0xff]
    %v1260 = vld [vmem:[#allocation25 + $0x8c] sm:$0xf]
    %v1261 = vld [vmem:[#allocation25 + $0x90] sm:$0xff]
    %v1262 = vld [vmem:[#allocation25 + $0x98] sm:$0xf]
    %v1263 = vld [vmem:[#allocation25 + $0x9c] sm:$0xff]
    %v1264 = vld [vmem:[#allocation25 + $0xa4] sm:$0xf]
    %v1265 = vld [vmem:[#allocation25 + $0xa8] sm:$0xff]
    %v1266 = vld [vmem:[#allocation25 + $0xb0] sm:$0xf]
    %v1267 = vld [vmem:[#allocation25 + $0xb4] sm:$0xff]
    %v1268 = vld [vmem:[#allocation25 + $0xbc] sm:$0xf]
    %v1269 = vld [vmem:[%s22] sm:$0x7]
    %v1271 = vlaneseq
    %v1272 = vshrl.u32 %v1271, 7
    %v1273 = vsub.s32 0, %v1272
    %v1274 = vrot.slane %v1269, %v1273
    %v1275 = vlaneseq
    %v1276 = vshrl.u32 %v1275, 7
    %v1277 = vsub.s32 1, %v1276
    %v1278 = vrot.slane %v1269, %v1277
    %v1279 = vlaneseq
    %v1280 = vshrl.u32 %v1279, 7
    %v1281 = vsub.s32 2, %v1280
    %v1282 = vrot.slane %v1269, %v1281
    %v1318 = vunpack.c.l.b16 %v1237
    %v1319 = vunpack.c.h.b16 %v1237
    %v1320 = vunpack.c.l.b16 %v1238
    %v1321 = vunpack.c.l.b16 %v1239
    %v1322 = vunpack.c.h.b16 %v1239
    %v1323 = vunpack.c.l.b16 %v1240
    %v1324 = vunpack.c.l.b16 %v1241
    %v1325 = vunpack.c.h.b16 %v1241
    %v1326 = vunpack.c.l.b16 %v1242
    %v1327 = vunpack.c.l.b16 %v1243
    %v1328 = vunpack.c.h.b16 %v1243
    %v1329 = vunpack.c.l.b16 %v1244
    %v1330 = vunpack.c.l.b16 %v1245
    %v1331 = vunpack.c.h.b16 %v1245
    %v1332 = vunpack.c.l.b16 %v1246
    %v1333 = vunpack.c.l.b16 %v1247
    %v1334 = vunpack.c.h.b16 %v1247
    %v1335 = vunpack.c.l.b16 %v1248
    %v1336 = vunpack.c.l.b16 %v1249
    %v1337 = vunpack.c.h.b16 %v1249
    %v1338 = vunpack.c.l.b16 %v1250
    %v1339 = vunpack.c.l.b16 %v1251
    %v1340 = vunpack.c.h.b16 %v1251
    %v1341 = vunpack.c.l.b16 %v1252
    %v1342 = vunpack.c.l.b16 %v1253
    %v1343 = vunpack.c.h.b16 %v1253
    %v1344 = vunpack.c.l.b16 %v1254
    %v1345 = vunpack.c.l.b16 %v1255
    %v1346 = vunpack.c.h.b16 %v1255
    %v1347 = vunpack.c.l.b16 %v1256
    %v1348 = vunpack.c.l.b16 %v1257
    %v1349 = vunpack.c.h.b16 %v1257
    %v1350 = vunpack.c.l.b16 %v1258
    %v1351 = vunpack.c.l.b16 %v1259
    %v1352 = vunpack.c.h.b16 %v1259
    %v1353 = vunpack.c.l.b16 %v1260
    %v1354 = vunpack.c.l.b16 %v1261
    %v1355 = vunpack.c.h.b16 %v1261
    %v1356 = vunpack.c.l.b16 %v1262
    %v1357 = vunpack.c.l.b16 %v1263
    %v1358 = vunpack.c.h.b16 %v1263
    %v1359 = vunpack.c.l.b16 %v1264
    %v1360 = vunpack.c.l.b16 %v1265
    %v1361 = vunpack.c.h.b16 %v1265
    %v1362 = vunpack.c.l.b16 %v1266
    %v1363 = vunpack.c.l.b16 %v1267
    %v1364 = vunpack.c.h.b16 %v1267
    %v1365 = vunpack.c.l.b16 %v1268
    %v1366 = vpack.c.b16 %v1321, %v1318
    %v1367 = vpack.c.b16 %v1322, %v1319
    %v1368 = vpack.c.b16 %v1323, %v1320
    %v1369 = vpack.c.b16 %v1327, %v1324
    %v1370 = vpack.c.b16 %v1328, %v1325
    %v1371 = vpack.c.b16 %v1329, %v1326
    %v1372 = vpack.c.b16 %v1333, %v1330
    %v1373 = vpack.c.b16 %v1334, %v1331
    %v1374 = vpack.c.b16 %v1335, %v1332
    %v1375 = vpack.c.b16 %v1339, %v1336
    %v1376 = vpack.c.b16 %v1340, %v1337
    %v1377 = vpack.c.b16 %v1341, %v1338
    %v1378 = vpack.c.b16 %v1345, %v1342
    %v1379 = vpack.c.b16 %v1346, %v1343
    %v1380 = vpack.c.b16 %v1347, %v1344
    %v1381 = vpack.c.b16 %v1351, %v1348
    %v1382 = vpack.c.b16 %v1352, %v1349
    %v1383 = vpack.c.b16 %v1353, %v1350
    %v1384 = vpack.c.b16 %v1357, %v1354
    %v1385 = vpack.c.b16 %v1358, %v1355
    %v1386 = vpack.c.b16 %v1359, %v1356
    %v1387 = vpack.c.b16 %v1363, %v1360
    %v1388 = vpack.c.b16 %v1364, %v1361
    %v1389 = vpack.c.b16 %v1365, %v1362
    %1414 = vmatprep.subr.bf16.mxu0 %v1388
    %1415 = vmatpush1.bf16.msra.mxu0 %v1387
    %1416 = vmatprep.subr.bf16.mxu0 %v1385
    %1417 = vmatpush1.bf16.msra.mxu0 %v1384
    %1418 = vmatprep.subr.bf16.mxu0 %v1382
    %1419 = vmatpush1.bf16.msra.mxu0 %v1381
    %1420 = vmatprep.subr.bf16.mxu0 %v1379
    %1421 = vmatpush1.bf16.msra.mxu0 %v1378
    %1422 = vmatprep.subr.bf16.mxu0 %v1376
    %1423 = vmatpush1.bf16.msra.mxu0 %v1375
    %1424 = vmatprep.subr.bf16.mxu0 %v1373
    %1425 = vmatpush1.bf16.msra.mxu0 %v1372
    %1426 = vmatprep.subr.bf16.mxu0 %v1370
    %1427 = vmatpush1.bf16.msra.mxu0 %v1369
    %1428 = vmatprep.subr.bf16.mxu0 %v1367
    %1429 = vmatpush1.bf16.msra.mxu0 %v1366
    %1430 = vmatprep.subr.bf16.mxu0 0
    %1431 = vmatpush2.bf16.msra.mxu0 0
    %1432 = vmatprep.subr.bf16.mxu0 0
    %1433 = vmatpush2.bf16.msra.mxu0 0
    %1434 = vmatprep.subr.bf16.mxu0 0
    %1435 = vmatpush2.bf16.msra.mxu0 0
    %1436 = vmatprep.subr.bf16.mxu0 0
    %1437 = vmatpush2.bf16.msra.mxu0 0
    %1438 = vmatprep.subr.bf16.mxu0 0
    %1439 = vmatpush2.bf16.msra.mxu0 0
    %1440 = vmatprep.subr.bf16.mxu0 0
    %1441 = vmatpush2.bf16.msra.mxu0 0
    %1442 = vmatprep.subr.bf16.mxu0 0
    %1443 = vmatpush2.bf16.msra.mxu0 0
    %1444 = vmatprep.subr.bf16.mxu0 0
    %1445 = vmatpush2.bf16.msra.mxu0 0
    %1446 = vmatprep.mubr.bf16.mxu0 0
    %1447 = vmatmul.mubr.bf16.gmra.mxu0 %v1236
    %v1448 = vpop.f32.mrf.mxu0
    %v1449 = vadd.f32 %v1274, %v1448
    %v1450 = vpop.f32.mrf.mxu0
    %v1451 = vadd.f32 %v1278, %v1450
    %v1452 = vpop.f32.mrf.mxu0
    %v1453 = vpop.f32.mrf.mxu0
    %1454 = vdwg.mxu0
    %1455 = vmatprep.subr.bf16.mxu0 0
    %1456 = vmatpush1.bf16.msra.mxu0 %v1389
    %1457 = vmatprep.subr.bf16.mxu0 0
    %1458 = vmatpush1.bf16.msra.mxu0 %v1386
    %1459 = vmatprep.subr.bf16.mxu0 0
    %1460 = vmatpush1.bf16.msra.mxu0 %v1383
    %1461 = vmatprep.subr.bf16.mxu0 0
    %1462 = vmatpush1.bf16.msra.mxu0 %v1380
    %1463 = vmatprep.subr.bf16.mxu0 0
    %1464 = vmatpush1.bf16.msra.mxu0 %v1377
    %1465 = vmatprep.subr.bf16.mxu0 0
    %1466 = vmatpush1.bf16.msra.mxu0 %v1374
    %1467 = vmatprep.subr.bf16.mxu0 0
    %1468 = vmatpush1.bf16.msra.mxu0 %v1371
    %1469 = vmatprep.subr.bf16.mxu0 0
    %1470 = vmatpush1.bf16.msra.mxu0 %v1368
    %1471 = vmatprep.subr.bf16.mxu0 0
    %1472 = vmatpush2.bf16.msra.mxu0 0
    %1473 = vmatprep.subr.bf16.mxu0 0
    %1474 = vmatpush2.bf16.msra.mxu0 0
    %1475 = vmatprep.subr.bf16.mxu0 0
    %1476 = vmatpush2.bf16.msra.mxu0 0
    %1477 = vmatprep.subr.bf16.mxu0 0
    %1478 = vmatpush2.bf16.msra.mxu0 0
    %1479 = vmatprep.subr.bf16.mxu0 0
    %1480 = vmatpush2.bf16.msra.mxu0 0
    %1481 = vmatprep.subr.bf16.mxu0 0
    %1482 = vmatpush2.bf16.msra.mxu0 0
    %1483 = vmatprep.subr.bf16.mxu0 0
    %1484 = vmatpush2.bf16.msra.mxu0 0
    %1485 = vmatprep.subr.bf16.mxu0 0
    %1486 = vmatpush2.bf16.msra.mxu0 0
    %1487 = vmatprep.mubr.bf16.mxu0 0
    %1488 = vmatmul.mubr.bf16.gmra.mxu0 %v1236
    %v1489 = vpop.f32.mrf.mxu0
    %v1490 = vadd.f32 %v1282, %v1489
    %v1491 = vpop.f32.mrf.mxu0
    %v1492 = vpop.f32.mrf.mxu0
    %v1493 = vpop.f32.mrf.mxu0
    %1494 = vdwg.mxu0
    %1495 = vmax.xlane.f32.xlu0 %v1449
    %v1496 = vpop.xlane.xlu0 %1495
    %v1497 = vsub.f32 %v1449, %v1496
    %v1498 = vmul.f32 %v1497, 1.442695
    %v1499 = vpow.pop %v1498
    %1500 = vadd.xlane.f32.xlu0 %v1499
    %v1501 = vpop.xlane.xlu0 %1500
    %v1502 = vrcp.pop %v1501
    %v1503 = vmul.f32 1.0, %v1502
    %v1504 = vmul.f32 %v1499, %v1503
    %1505 = vst [vmem:[#allocation26] sm:$0xff] %v1504
    %v1506 = vmax.f32 %v1451, %v1490
    %1507 = vmax.xlane.f32.xlu0 %v1506
    %v1508 = vpop.xlane.xlu0 %1507
    %v1509 = vsub.f32 %v1451, %v1508
    %v1510 = vsub.f32 %v1490, %v1508
    %v1511 = vmul.f32 %v1509, 1.442695
    %v1512 = vpow.pop %v1511
    %v1513 = vmul.f32 %v1510, 1.442695
    %v1514 = vpow.pop %v1513
    %v1515 = vadd.f32 %v1512, %v1514
    %1516 = vadd.xlane.f32.xlu0 %v1515
    %v1517 = vpop.xlane.xlu0 %1516
    %v1518 = vrcp.pop %v1517
    %v1519 = vmul.f32 1.0, %v1518
    %v1520 = vmul.f32 %v1512, %v1519
    %v1521 = vmul.f32 %v1514, %v1519
    %1522 = vst [vmem:[#allocation26 + $0x8] sm:$0xff] %v1520
    %1523 = vst [vmem:[#allocation26 + $0x10] sm:$0xff] %v1521
    // Predicated region
    $region154: #{tpu_custom_call.1} parent=1 // pred_check
      _
    $region155: #{tpu_custom_call.1} parent=1 // pred_check_branch
      %1525 = sbr.rel (0) target = $region157
    $region156: #{tpu_custom_call.1} parent=1 // pred_region
      %s1527 = ssub.s32 384, 384
      %1528 = vsyncadd [#allocation4], %s1527
      %s1530 = sshll.u32 [#allocation26], 4
      %s1531 = int_to_ptr.vmem [resolvable:$true] %s1530
      %1533 = dma.vmem_to_hbm [thread:$0]  %s1531, 384, %s23, [#allocation4]
    $region157: #{tpu_custom_call.1} parent=1 // pred_fallthru
      _
    // Predicated region
    $region158: #{tpu_custom_call.1} parent=1 // pred_check
      _
    $region159: #{tpu_custom_call.1} parent=1 // pred_check_branch
      %1535 = sbr.rel (0) target = $region161
    $region160: #{tpu_custom_call.1} parent=1 // pred_region
      %s1537 = ssub.s32 256, 256
      %1538 = vsyncadd [#allocation28], %s1537
      %s1540 = sshll.u32 [#allocation27], 4
      %s1541 = int_to_ptr.vmem [resolvable:$true] %s1540
      %1543 = dma.vmem_to_hbm [thread:$0]  %s1541, 256, %s24, [#allocation28]
    $region161: #{tpu_custom_call.1} parent=1 // pred_fallthru
      _
    // Predicated region
    $region162: #{tpu_custom_call.1} parent=1 // pred_check
      _
    $region163: #{tpu_custom_call.1} parent=1 // pred_check_branch
      %1545 = sbr.rel (0) target = $region165
    $region164: #{tpu_custom_call.1} parent=1 // pred_region
      %1546 = dma.done [#allocation4], 384
    $region165: #{tpu_custom_call.1} parent=1 // pred_fallthru
      _
    // Predicated region
    $region166: #{tpu_custom_call.1} parent=1 // pred_check
      _
    $region167: #{tpu_custom_call.1} parent=1 // pred_check_branch
      %1548 = sbr.rel (0) target = $region169
    $region168: #{tpu_custom_call.1} parent=1 // pred_region
      %1549 = dma.done [#allocation28], 256
    $region169: #{tpu_custom_call.1} parent=1 // pred_fallthru
      _
    %1550 = vsyncpa [#allocation3], 1
    %1551 = vsyncpa [#allocation6], 1
    %1552 = vsyncpa [#allocation9], 1
    %1553 = vsyncpa [#allocation12], 1
    %1554 = vsyncpa [#allocation15], 1
    %1555 = vsyncpa [#allocation18], 1
    %1556 = vsyncpa [#allocation21], 1
    %1557 = vsyncpa [#allocation24], 1
    %1558 = vsyncpa [#allocation4], 1
    %1559 = vsyncpa [#allocation28], 1

</llo_original>
